<compile_context>
chip_gen: v6e
topology: v6e:2x2x1
jax: 0.10.0
libtpu: 0.0.40
codegen_flags: <defaults>
</compile_context>

<pallas_src>
import functools

import jax
import jax.numpy as jnp
from jax.experimental import pallas as pl
from jax.experimental.pallas import tpu as pltpu


def _s_gnn_kernel(x_ref, w1_ref, w2_ref, w3_ref, mask_ref, o_ref):
    # x_ref:    (G, N, F)   group of G graph slices
    # w1_ref:   (F, F)      latent-encoder linear 1, (in, out) layout
    # w2_ref:   (F, F//2)   latent-encoder linear 2, (in, out) layout
    # w3_ref:   (F, F)      output linear, (in, out) layout
    # mask_ref: (N, N)      float {0, 1} mask of (A_hat > 0)
    x = x_ref[...].astype(jnp.float32)                       # (G, N, F)
    G, N, F = x.shape

    # ---- latent encoder: two bias-free linears (flattened -> plain MXU matmuls)
    x2d = x.reshape(G * N, F)
    h = jnp.dot(x2d, w1_ref[...], preferred_element_type=jnp.float32)    # (G*N, F)
    p = jnp.dot(h, w2_ref[...], preferred_element_type=jnp.float32)      # (G*N, F/2)
    p = p.reshape(G, N, -1)

    # ---- pairwise similarity + row softmax (shift-invariant, same as torch)
    s = jnp.einsum("gnh,gmh->gnm", p, p,
                   preferred_element_type=jnp.float32)                   # (G, N, N)
    s = s - jnp.max(s, axis=-1, keepdims=True)
    e = jnp.exp(s)
    r = e / jnp.sum(e, axis=-1, keepdims=True)

    # ---- mask with adjacency, add self loops
    row = jax.lax.broadcasted_iota(jnp.int32, (N, N), 0)
    col = jax.lax.broadcasted_iota(jnp.int32, (N, N), 1)
    eye = (row == col).astype(jnp.float32)
    r_hat = r * mask_ref[...][None, :, :] + eye[None, :, :]              # (G, N, N)

    # ---- symmetric normalization + aggregation:
    #      diag(d) @ R_hat @ diag(d) @ x  ==  d * (R_hat @ (d * x))
    d = jax.lax.rsqrt(jnp.sum(r_hat, axis=-1, keepdims=True))            # (G, N, 1)
    xd = x * d
    y = jnp.einsum("gnm,gmf->gnf", r_hat, xd,
                   preferred_element_type=jnp.float32) * d               # (G, N, F)

    # ---- output linear + relu
    out = jnp.dot(y.reshape(G * N, F), w3_ref[...],
                  preferred_element_type=jnp.float32)
    o_ref[...] = jnp.maximum(out, 0.0).reshape(G, N, F).astype(o_ref.dtype)


@functools.partial(jax.jit, static_argnames=("graphs_per_step",))
def s_gnn_forward(x, w1, w2, w3, a_hat, *, graphs_per_step=4):
    """x: (B, T, N, F); w1: (F, F); w2: (F//2, F); w3: (F, F); a_hat: (N, N).

    Weights are in PyTorch nn.Linear layout (out_features, in_features).
    """
    B, T, N, F = x.shape
    BT = B * T
    G = min(graphs_per_step, BT)

    xg = x.reshape(BT, N, F)
    n_steps = pl.cdiv(BT, G)
    pad = n_steps * G - BT
    if pad:
        xg = jnp.concatenate([xg, jnp.zeros((pad, N, F), xg.dtype)], axis=0)

    # Pre-transpose weights to (in, out); precompute the {0,1} adjacency mask.
    w1_t = w1.T
    w2_t = w2.T
    w3_t = w3.T
    mask = (a_hat > 0).astype(jnp.float32)

    flops_per_graph = (
        2 * N * F * F               # linear 1
        + 2 * N * F * (F // 2)      # linear 2
        + 2 * N * N * (F // 2)      # p @ p.T
        + 2 * N * N * F             # R_hat @ x
        + 2 * N * F * F             # output linear
    )
    itemsize = jnp.dtype(x.dtype).itemsize
    cost = pl.CostEstimate(
        flops=BT * flops_per_graph,
        transcendentals=BT * N * (N + 1),            # exp + rsqrt
        bytes_accessed=2 * BT * N * F * itemsize
        + (2 * F * F + F * (F // 2) + N * N) * 4,
    )

    out = pl.pallas_call(
        _s_gnn_kernel,
        out_shape=jax.ShapeDtypeStruct((n_steps * G, N, F), x.dtype),
        grid_spec=pltpu.PrefetchScalarGridSpec(
            num_scalar_prefetch=0,
            grid=(n_steps,),
            in_specs=[
                # One group of G graphs per grid step.
                pl.BlockSpec((G, N, F), lambda i: (i, 0, 0)),
                # Weights / mask: constant index_map -> resident in VMEM.
                pl.BlockSpec((F, F), lambda i: (0, 0)),
                pl.BlockSpec((F, F // 2), lambda i: (0, 0)),
                pl.BlockSpec((F, F), lambda i: (0, 0)),
                pl.BlockSpec((N, N), lambda i: (0, 0)),
            ],
            out_specs=pl.BlockSpec((G, N, F), lambda i: (i, 0, 0)),
        ),
        compiler_params=pltpu.CompilerParams(
            dimension_semantics=("parallel",),
        ),
        cost_estimate=cost,
    )(xg, w1_t, w2_t, w3_t, mask)

    return out[:BT].reshape(B, T, N, F)


def s_gnn_ref(x, w1, w2, w3, a_hat):
    """Pure-JAX reference mirroring the PyTorch forward exactly."""
    N = x.shape[-2]
    p = x @ w1.T @ w2.T
    s = p @ jnp.swapaxes(p, -1, -2)
    s = s - jnp.max(s, axis=-1, keepdims=True)
    r = jax.nn.softmax(s, axis=-1)
    mask = (a_hat > 0).astype(x.dtype)
    r_hat = r * mask + jnp.eye(N, dtype=x.dtype)
    d = jnp.sum(r_hat, axis=-1) ** (-0.5)
    d_hat = d[..., :, None] * jnp.eye(N, dtype=x.dtype)   # diag_embed
    a = d_hat @ r_hat @ d_hat
    return jax.nn.relu((a @ x) @ w3.T)


if __name__ == "__main__":
    # Small shapes: batch=2, timesteps=8, nodes=16, features=32.
    B, T, N, F = 2, 8, 16, 32
    key = jax.random.PRNGKey(0)
    kx, k1, k2, k3, ka = jax.random.split(key, 5)

    x = jax.random.normal(kx, (B, T, N, F), dtype=jnp.float32)
    # PyTorch nn.Linear weight layout: (out_features, in_features), no bias.
    scale = 1.0 / (F ** 0.5)
    w1 = jax.random.normal(k1, (F, F), dtype=jnp.float32) * scale
    w2 = jax.random.normal(k2, (F // 2, F), dtype=jnp.float32) * scale
    w3 = jax.random.normal(k3, (F, F), dtype=jnp.float32) * scale
    # Refined adjacency: mix of positive and non-positive entries.
    a_hat = jax.random.uniform(ka, (N, N), dtype=jnp.float32) - 0.3

    out = s_gnn_forward(x, w1, w2, w3, a_hat)
    out = jax.block_until_ready(out)

    ref = s_gnn_ref(x, w1, w2, w3, a_hat)
    assert out.shape == (B, T, N, F)
    assert jnp.allclose(out, ref, atol=1e-4, rtol=1e-4), float(
        jnp.max(jnp.abs(out - ref))
    )

    print("KERNEL_OK")
</pallas_src>

<mosaic_0001>
module attributes {stable_mosaic.version = 11 : i64} {
  func.func @_s_gnn_kernel(%arg0: i32, %arg1: memref<4x16x32xf32, #tpu.memory_space<vmem>>, %arg2: memref<32x32xf32, #tpu.memory_space<vmem>>, %arg3: memref<32x16xf32, #tpu.memory_space<vmem>>, %arg4: memref<32x32xf32, #tpu.memory_space<vmem>>, %arg5: memref<16x16xf32, #tpu.memory_space<vmem>>, %arg6: memref<4x16x32xf32, #tpu.memory_space<vmem>>) attributes {dimension_semantics = [#tpu.dimension_semantics<parallel>], iteration_bounds = array<i64: 4>, scalar_prefetch = 0 : i64, scratch_operands = 0 : i64, tpu.core_type = #tpu.core_type<tc>, window_params = [{transform_indices = @transform_0, window_bounds = array<i64: 4, 16, 32>}, {pipeline_mode = #tpu.pipeline_mode<synchronous>, transform_indices = @transform_1, window_bounds = array<i64: 32, 32>}, {pipeline_mode = #tpu.pipeline_mode<synchronous>, transform_indices = @transform_2, window_bounds = array<i64: 32, 16>}, {pipeline_mode = #tpu.pipeline_mode<synchronous>, transform_indices = @transform_3, window_bounds = array<i64: 32, 32>}, {pipeline_mode = #tpu.pipeline_mode<synchronous>, transform_indices = @transform_4, window_bounds = array<i64: 16, 16>}, {transform_indices = @transform_5, window_bounds = array<i64: 4, 16, 32>}]} {
    %c0 = arith.constant 0 : index
    %c0_0 = arith.constant 0 : index
    %c0_1 = arith.constant 0 : index
    %0 = vector.load %arg1[%c0, %c0_0, %c0_1] : memref<4x16x32xf32, #tpu.memory_space<vmem>>, vector<4x16x32xf32>
    %1 = vector.shape_cast %0 : vector<4x16x32xf32> to vector<64x32xf32>
    %c0_2 = arith.constant 0 : index
    %c0_3 = arith.constant 0 : index
    %2 = vector.load %arg2[%c0_2, %c0_3] : memref<32x32xf32, #tpu.memory_space<vmem>>, vector<32x32xf32>
    %cst = arith.constant dense<0.000000e+00> : vector<64x32xf32>
    %3 = tpu.matmul %1, %2, %cst {dimension_numbers = #tpu.dot_dimension_numbers<[1], [0], [0], [1], [0, 0, 1, 1], [], []>} : vector<64x32xf32>, vector<32x32xf32>, vector<64x32xf32> -> vector<64x32xf32>
    %c0_4 = arith.constant 0 : index
    %c0_5 = arith.constant 0 : index
    %4 = vector.load %arg3[%c0_4, %c0_5] : memref<32x16xf32, #tpu.memory_space<vmem>>, vector<32x16xf32>
    %cst_6 = arith.constant dense<0.000000e+00> : vector<64x16xf32>
    %5 = tpu.matmul %3, %4, %cst_6 {dimension_numbers = #tpu.dot_dimension_numbers<[1], [0], [0], [1], [0, 0, 1, 1], [], []>} : vector<64x32xf32>, vector<32x16xf32>, vector<64x16xf32> -> vector<64x16xf32>
    %6 = vector.shape_cast %5 : vector<64x16xf32> to vector<4x16x16xf32>
    "tpu.trace_start"() <{level = 10 : i32, message = "gnh,gmh->gnm"}> : () -> ()
    %cst_7 = arith.constant dense<0.000000e+00> : vector<4x16x16xf32>
    %7 = tpu.matmul %6, %6, %cst_7 {dimension_numbers = #tpu.dot_dimension_numbers<[2], [2], [1], [1], [0, 0, 0, 1, 1, 1], [0], [0]>} : vector<4x16x16xf32>, vector<4x16x16xf32>, vector<4x16x16xf32> -> vector<4x16x16xf32>
    "tpu.trace_stop"() : () -> ()
    %cst_8 = arith.constant dense<0xFF800000> : vector<4x16xf32>
    %8 = vector.multi_reduction <maximumf>, %7, %cst_8 [2] : vector<4x16x16xf32> to vector<4x16xf32>
    %9 = vector.shape_cast %8 : vector<4x16xf32> to vector<4x16x1xf32>
    %10 = vector.broadcast %9 : vector<4x16x1xf32> to vector<4x16x16xf32>
    %11 = arith.subf %7, %10 : vector<4x16x16xf32>
    %12 = math.exp %11 : vector<4x16x16xf32>
    %cst_9 = arith.constant dense<0.000000e+00> : vector<4x16xf32>
    %13 = vector.multi_reduction <add>, %12, %cst_9 [2] : vector<4x16x16xf32> to vector<4x16xf32>
    %14 = vector.shape_cast %13 : vector<4x16xf32> to vector<4x16x1xf32>
    %15 = vector.broadcast %14 : vector<4x16x1xf32> to vector<4x16x16xf32>
    %16 = arith.divf %12, %15 : vector<4x16x16xf32>
    %17 = tpu.iota {dimensions = array<i32: 0>} : vector<16x16xi32>
    %18 = tpu.iota {dimensions = array<i32: 1>} : vector<16x16xi32>
    %19 = arith.cmpi eq, %17, %18 : vector<16x16xi32>
    %20 = arith.extui %19 : vector<16x16xi1> to vector<16x16xi32>
    %21 = arith.sitofp %20 : vector<16x16xi32> to vector<16x16xf32>
    %c0_10 = arith.constant 0 : index
    %c0_11 = arith.constant 0 : index
    %22 = vector.load %arg5[%c0_10, %c0_11] : memref<16x16xf32, #tpu.memory_space<vmem>>, vector<16x16xf32>
    %23 = vector.shape_cast %22 : vector<16x16xf32> to vector<1x16x16xf32>
    %24 = vector.broadcast %23 : vector<1x16x16xf32> to vector<4x16x16xf32>
    %25 = arith.mulf %16, %24 : vector<4x16x16xf32>
    %26 = vector.shape_cast %21 : vector<16x16xf32> to vector<1x16x16xf32>
    %27 = vector.broadcast %26 : vector<1x16x16xf32> to vector<4x16x16xf32>
    %28 = arith.addf %25, %27 : vector<4x16x16xf32>
    %cst_12 = arith.constant dense<0.000000e+00> : vector<4x16xf32>
    %29 = vector.multi_reduction <add>, %28, %cst_12 [2] : vector<4x16x16xf32> to vector<4x16xf32>
    %30 = vector.shape_cast %29 : vector<4x16xf32> to vector<4x16x1xf32>
    %31 = math.rsqrt %30 : vector<4x16x1xf32>
    %32 = vector.broadcast %31 : vector<4x16x1xf32> to vector<4x16x32xf32>
    %33 = arith.mulf %0, %32 : vector<4x16x32xf32>
    "tpu.trace_start"() <{level = 10 : i32, message = "gnm,gmf->gnf"}> : () -> ()
    %cst_13 = arith.constant dense<0.000000e+00> : vector<4x16x32xf32>
    %34 = tpu.matmul %28, %33, %cst_13 {dimension_numbers = #tpu.dot_dimension_numbers<[2], [1], [1], [2], [0, 0, 0, 1, 1, 2], [0], [0]>} : vector<4x16x16xf32>, vector<4x16x32xf32>, vector<4x16x32xf32> -> vector<4x16x32xf32>
    "tpu.trace_stop"() : () -> ()
    %35 = vector.broadcast %31 : vector<4x16x1xf32> to vector<4x16x32xf32>
    %36 = arith.mulf %34, %35 : vector<4x16x32xf32>
    %37 = vector.shape_cast %36 : vector<4x16x32xf32> to vector<64x32xf32>
    %c0_14 = arith.constant 0 : index
    %c0_15 = arith.constant 0 : index
    %38 = vector.load %arg4[%c0_14, %c0_15] : memref<32x32xf32, #tpu.memory_space<vmem>>, vector<32x32xf32>
    %cst_16 = arith.constant dense<0.000000e+00> : vector<64x32xf32>
    %39 = tpu.matmul %37, %38, %cst_16 {dimension_numbers = #tpu.dot_dimension_numbers<[1], [0], [0], [1], [0, 0, 1, 1], [], []>} : vector<64x32xf32>, vector<32x32xf32>, vector<64x32xf32> -> vector<64x32xf32>
    %cst_17 = arith.constant 0.000000e+00 : f32
    %40 = vector.broadcast %cst_17 : f32 to vector<64x32xf32>
    %41 = arith.maximumf %39, %40 : vector<64x32xf32>
    %42 = vector.shape_cast %41 : vector<64x32xf32> to vector<4x16x32xf32>
    %c0_18 = arith.constant 0 : index
    %c0_19 = arith.constant 0 : index
    %c0_20 = arith.constant 0 : index
    %43 = vector.load %arg6[%c0_18, %c0_19, %c0_20] : memref<4x16x32xf32, #tpu.memory_space<vmem>>, vector<4x16x32xf32>
    tpu.vector_store %arg6[%c0_18, %c0_19, %c0_20], %42 {strides = array<i32>} : memref<4x16x32xf32, #tpu.memory_space<vmem>>, vector<4x16x32xf32>,
    return
  }
  func.func @transform_0(%arg0: i32) -> (i32, i32, i32) {
    %c0_i32 = arith.constant 0 : i32
    %c0_i32_0 = arith.constant 0 : i32
    %c0_i32_1 = arith.constant 0 : i32
    return %arg0, %c0_i32, %c0_i32_0 : i32, i32, i32
  }
  func.func @transform_1(%arg0: i32) -> (i32, i32) {
    %c0_i32 = arith.constant 0 : i32
    %c0_i32_0 = arith.constant 0 : i32
    %c0_i32_1 = arith.constant 0 : i32
    return %c0_i32, %c0_i32_0 : i32, i32
  }
  func.func @transform_2(%arg0: i32) -> (i32, i32) {
    %c0_i32 = arith.constant 0 : i32
    %c0_i32_0 = arith.constant 0 : i32
    %c0_i32_1 = arith.constant 0 : i32
    return %c0_i32, %c0_i32_0 : i32, i32
  }
  func.func @transform_3(%arg0: i32) -> (i32, i32) {
    %c0_i32 = arith.constant 0 : i32
    %c0_i32_0 = arith.constant 0 : i32
    %c0_i32_1 = arith.constant 0 : i32
    return %c0_i32, %c0_i32_0 : i32, i32
  }
  func.func @transform_4(%arg0: i32) -> (i32, i32) {
    %c0_i32 = arith.constant 0 : i32
    %c0_i32_0 = arith.constant 0 : i32
    %c0_i32_1 = arith.constant 0 : i32
    return %c0_i32, %c0_i32_0 : i32, i32
  }
  func.func @transform_5(%arg0: i32) -> (i32, i32, i32) {
    %c0_i32 = arith.constant 0 : i32
    %c0_i32_0 = arith.constant 0 : i32
    %c0_i32_1 = arith.constant 0 : i32
    return %arg0, %c0_i32, %c0_i32_0 : i32, i32, i32
  }
}

</mosaic_0001>

<llo_original>
// kernel: s_gnn_forward.1
$region0: #{s_gnn_forward.1}
  #allocation0 [shape = 'u32[]', space=smem, size = 0x4, offset = 0x4, fixed_abs, tag = 'smem constant byte address 0x4 - core index']
  #allocation1 [shape = 'u32[144,128]{1,0:T(1,128)}', space=vmem, size = 0x12000, scoped, tag = 'internal scratch']
  %s0 = inlined_call_operand.hbm [shape: f32[16,16,32], index: 0, kind: input, shape index: {}]
  %s1 = inlined_call_operand.vmem [shape: f32[32,32], index: 1, kind: input, shape index: {}]
  %s2 = inlined_call_operand.vmem [shape: f32[32,16], index: 2, kind: input, shape index: {}]
  %s3 = inlined_call_operand.vmem [shape: f32[32,32], index: 3, kind: input, shape index: {}]
  %s4 = inlined_call_operand.vmem [shape: f32[16,16], index: 4, kind: input, shape index: {}]
  %s5 = inlined_call_operand.hbm [shape: f32[16,16,32], index: 5, kind: output, shape index: {}]
  %s6 = sld [smem:[#allocation0]]
  $region57: #{s_gnn_forward.1} parent=0
    _
  %s8 = ssub.s32 1, %s6
  %s9 = scalar_select 0, %s8, %s6
  $region1: #{s_gnn_forward.1} parent=0
    #allocation2 [shape = 'u8[65536]{0}', space=vmem, size = 0x10000, scoped, tag = 'input window, operand 0']
    #allocation3 [shape = 's32[2]{0}', space=sflag, size = 0x8, scoped, tag = 'scoped memory for s_gnn_forward.1']
    #allocation4 [shape = 's32[2]{0}', space=sflag, size = 0x8, scoped, tag = 'scoped memory for s_gnn_forward.1']
    #allocation5 [shape = 'u8[65536]{0}', space=vmem, size = 0x10000, scoped, tag = 'output window, operand 0']
    %10 = vsyncpa [#allocation3], 0
    %s11 = scalar_lea.sflag [#allocation3], 1
    %12 = vsyncpa %s11, 0
    %13 = vsyncpa [#allocation4], 0
    %s14 = scalar_lea.sflag [#allocation4], 1
    %15 = vsyncpa %s14, 0
    loop: start=0, step=1, limit=6
    $region2: #{s_gnn_forward.1} parent=1 // loop_pre_header
      _
    $region3: #{s_gnn_forward.1} parent=1 // loop_header
      %s17 = sphi 0, %s21
      %p18 = scmp.ge.s32.totalorder %s17, 6
      %s27 = sphi 0, %s29
      %s30 = sphi 0, %s27
      %s31 = sphi 0, %s30
      %s47 = sphi 0, %s31
      %s51 = sphi 0, %s51
      %s53 = sphi 0, %s51
      %s54 = sphi 0, %s53
      %s68 = sphi 0, %s54
      %s72 = sphi 0, %s72
      %s74 = sphi 0, %s72
      %s75 = sphi 0, %s74
      %s89 = sphi 0, %s75
      %s93 = sphi 0, %s93
      %s95 = sphi 0, %s93
      %s96 = sphi 0, %s95
      %s110 = sphi 0, %s96
      %s114 = sphi 0, %s114
      %s116 = sphi 0, %s114
      %s117 = sphi 0, %s116
      %s131 = sphi 0, %s117
      %s137 = sphi 0, %s139
      %s140 = sphi 0, %s137
      %s141 = sphi 0, %s140
      %s157 = sphi 0, %s141
    $region4: #{s_gnn_forward.1} parent=1 // loop_header_branch
      %20 = sbr.rel (%p18) target = $region8
    $region5: #{s_gnn_forward.1} parent=1 // loop_body
      %s22 = ssub.s32 %s17, 1
      %s23 = ssub.s32 %s17, 2
      %s24 = sadd.s32 %s17, 1
      %s25 = ssub.s32 %s17, %s24
      %p26 = scmp.eq.s32.totalorder %s25, 0
      %s28 = sadd.s32 %s27, 1
      %s29 = scalar_select %p26, %s27, %s28
      %p32 = pneg %p26
      %p33 = scmp.eq.s32.totalorder %s17, 3
      %p34 = por %p32, %p33
      %p35 = scmp.ne.s32.totalorder %s27, %s30
      %p36 = scmp.eq.s32.totalorder %s17, 0
      %p37 = por %p35, %p36
      %p38 = scmp.ne.s32.totalorder %s27, %s30
      %p39 = scmp.eq.s32.totalorder %s22, 3
      %p40 = por %p38, %p39
      %p41 = scmp.ne.s32.totalorder %s30, %s31
      %p42 = scmp.eq.s32.totalorder %s22, 0
      %p43 = por %p41, %p42
      %p44 = scmp.ne.s32.totalorder %s30, %s31
      %p45 = scmp.eq.s32.totalorder %s23, 3
      %p46 = por %p44, %p45
      %p48 = scmp.ne.s32.totalorder %s31, %s47
      %p49 = scmp.eq.s32.totalorder %s23, 0
      %p50 = por %p48, %p49
      %s52 = sadd.s32 %s51, 1
      %p55 = scmp.eq.s32.totalorder %s17, 3
      %p56 = scmp.ne.s32.totalorder %s51, %s53
      %p57 = scmp.eq.s32.totalorder %s17, 0
      %p58 = por %p56, %p57
      %p59 = scmp.ne.s32.totalorder %s51, %s53
      %p60 = scmp.eq.s32.totalorder %s22, 3
      %p61 = por %p59, %p60
      %p62 = scmp.ne.s32.totalorder %s53, %s54
      %p63 = scmp.eq.s32.totalorder %s22, 0
      %p64 = por %p62, %p63
      %p65 = scmp.ne.s32.totalorder %s53, %s54
      %p66 = scmp.eq.s32.totalorder %s23, 3
      %p67 = por %p65, %p66
      %p69 = scmp.ne.s32.totalorder %s54, %s68
      %p70 = scmp.eq.s32.totalorder %s23, 0
      %p71 = por %p69, %p70
      %s73 = sadd.s32 %s72, 1
      %p76 = scmp.eq.s32.totalorder %s17, 3
      %p77 = scmp.ne.s32.totalorder %s72, %s74
      %p78 = scmp.eq.s32.totalorder %s17, 0
      %p79 = por %p77, %p78
      %p80 = scmp.ne.s32.totalorder %s72, %s74
      %p81 = scmp.eq.s32.totalorder %s22, 3
      %p82 = por %p80, %p81
      %p83 = scmp.ne.s32.totalorder %s74, %s75
      %p84 = scmp.eq.s32.totalorder %s22, 0
      %p85 = por %p83, %p84
      %p86 = scmp.ne.s32.totalorder %s74, %s75
      %p87 = scmp.eq.s32.totalorder %s23, 3
      %p88 = por %p86, %p87
      %p90 = scmp.ne.s32.totalorder %s75, %s89
      %p91 = scmp.eq.s32.totalorder %s23, 0
      %p92 = por %p90, %p91
      %s94 = sadd.s32 %s93, 1
      %p97 = scmp.eq.s32.totalorder %s17, 3
      %p98 = scmp.ne.s32.totalorder %s93, %s95
      %p99 = scmp.eq.s32.totalorder %s17, 0
      %p100 = por %p98, %p99
      %p101 = scmp.ne.s32.totalorder %s93, %s95
      %p102 = scmp.eq.s32.totalorder %s22, 3
      %p103 = por %p101, %p102
      %p104 = scmp.ne.s32.totalorder %s95, %s96
      %p105 = scmp.eq.s32.totalorder %s22, 0
      %p106 = por %p104, %p105
      %p107 = scmp.ne.s32.totalorder %s95, %s96
      %p108 = scmp.eq.s32.totalorder %s23, 3
      %p109 = por %p107, %p108
      %p111 = scmp.ne.s32.totalorder %s96, %s110
      %p112 = scmp.eq.s32.totalorder %s23, 0
      %p113 = por %p111, %p112
      %s115 = sadd.s32 %s114, 1
      %p118 = scmp.eq.s32.totalorder %s17, 3
      %p119 = scmp.ne.s32.totalorder %s114, %s116
      %p120 = scmp.eq.s32.totalorder %s17, 0
      %p121 = por %p119, %p120
      %p122 = scmp.ne.s32.totalorder %s114, %s116
      %p123 = scmp.eq.s32.totalorder %s22, 3
      %p124 = por %p122, %p123
      %p125 = scmp.ne.s32.totalorder %s116, %s117
      %p126 = scmp.eq.s32.totalorder %s22, 0
      %p127 = por %p125, %p126
      %p128 = scmp.ne.s32.totalorder %s116, %s117
      %p129 = scmp.eq.s32.totalorder %s23, 3
      %p130 = por %p128, %p129
      %p132 = scmp.ne.s32.totalorder %s117, %s131
      %p133 = scmp.eq.s32.totalorder %s23, 0
      %p134 = por %p132, %p133
      %s135 = ssub.s32 %s17, %s24
      %p136 = scmp.eq.s32.totalorder %s135, 0
      %s138 = sadd.s32 %s137, 1
      %s139 = scalar_select %p136, %s137, %s138
      %p142 = pneg %p136
      %p143 = scmp.eq.s32.totalorder %s17, 3
      %p144 = por %p142, %p143
      %p145 = scmp.ne.s32.totalorder %s137, %s140
      %p146 = scmp.eq.s32.totalorder %s17, 0
      %p147 = por %p145, %p146
      %p148 = scmp.ne.s32.totalorder %s137, %s140
      %p149 = scmp.eq.s32.totalorder %s22, 3
      %p150 = por %p148, %p149
      %p151 = scmp.ne.s32.totalorder %s140, %s141
      %p152 = scmp.eq.s32.totalorder %s22, 0
      %p153 = por %p151, %p152
      %p154 = scmp.ne.s32.totalorder %s140, %s141
      %p155 = scmp.eq.s32.totalorder %s23, 3
      %p156 = por %p154, %p155
      %p158 = scmp.ne.s32.totalorder %s141, %s157
      %p159 = scmp.eq.s32.totalorder %s23, 0
      %p160 = por %p158, %p159
      %p161 = scmp.le.s32.totalorder 1, %s17
      %p162 = scmp.lt.s32.totalorder %s17, 5
      %p163 = pnand %p161, %p162
      %p164 = pneg %p163
      // Predicated region
      $region9: #{s_gnn_forward.1} parent=5 // pred_check
        _
      $region10: #{s_gnn_forward.1} parent=5 // pred_check_branch
        %166 = sbr.rel (%p163) target = $region12
      $region11: #{s_gnn_forward.1} parent=5 // pred_region
        %s167 = ssub.s32 %s17, 1
        // Predicated region
        $region13: #{s_gnn_forward.1} parent=11 // pred_check
          %p168 = pneg %p64
        $region14: #{s_gnn_forward.1} parent=11 // pred_check_branch
          %170 = sbr.rel (%p168) target = $region16
        $region15: #{s_gnn_forward.1} parent=11 // pred_region
          _
        $region16: #{s_gnn_forward.1} parent=11 // pred_fallthru
          _
        // Predicated region
        $region17: #{s_gnn_forward.1} parent=11 // pred_check
          %p171 = pneg %p85
        $region18: #{s_gnn_forward.1} parent=11 // pred_check_branch
          %173 = sbr.rel (%p171) target = $region20
        $region19: #{s_gnn_forward.1} parent=11 // pred_region
          _
        $region20: #{s_gnn_forward.1} parent=11 // pred_fallthru
          _
        // Predicated region
        $region21: #{s_gnn_forward.1} parent=11 // pred_check
          %p174 = pneg %p106
        $region22: #{s_gnn_forward.1} parent=11 // pred_check_branch
          %176 = sbr.rel (%p174) target = $region24
        $region23: #{s_gnn_forward.1} parent=11 // pred_region
          _
        $region24: #{s_gnn_forward.1} parent=11 // pred_fallthru
          _
        // Predicated region
        $region25: #{s_gnn_forward.1} parent=11 // pred_check
          %p177 = pneg %p127
        $region26: #{s_gnn_forward.1} parent=11 // pred_check_branch
          %179 = sbr.rel (%p177) target = $region28
        $region27: #{s_gnn_forward.1} parent=11 // pred_region
          _
        $region28: #{s_gnn_forward.1} parent=11 // pred_fallthru
          _
      $region12: #{s_gnn_forward.1} parent=5 // pred_fallthru
        _
      %p180 = scmp.lt.s32.totalorder %s17, 4
      // Predicated region
      $region29: #{s_gnn_forward.1} parent=5 // pred_check
        %p181 = pneg %p180
      $region30: #{s_gnn_forward.1} parent=5 // pred_check_branch
        %183 = sbr.rel (%p181) target = $region32
      $region31: #{s_gnn_forward.1} parent=5 // pred_region
        // Predicated region
        $region33: #{s_gnn_forward.1} parent=31 // pred_check
          %p184 = pneg %p37
        $region34: #{s_gnn_forward.1} parent=31 // pred_check_branch
          %186 = sbr.rel (%p184) target = $region36
        $region35: #{s_gnn_forward.1} parent=31 // pred_region
          %s187 = sand.u32 %s27, 1
          %s188 = scalar_lea.sflag [#allocation3], %s187
          %s189 = sand.u32 %s27, 1
          %s190 = smul.addr %s189, 64
          %s191 = scalar_lea.vmem [#allocation2], %s190
          %s192 = smul.u32 4, %s17
          %s194 = ssub.s32 1024, 1024
          %195 = vsyncadd %s188, %s194
          %s196 = smul.addr %s192, 2
          %s197 = smul.addr %s196, 128
          %s198 = scalar_lea.hbm %s0, %s197
          %s199 = sshll.u32 %s191, 4
          %s200 = int_to_ptr.vmem [resolvable:$true] %s199
          %205 = dma.hbm_to_vmem [thread:$0]  %s198, 1024, %s200, %s188, 128, 128, 8
        $region36: #{s_gnn_forward.1} parent=31 // pred_fallthru
          _
      $region32: #{s_gnn_forward.1} parent=5 // pred_fallthru
        _
      %p206 = scmp.le.s32.totalorder 1, %s17
      %p207 = scmp.lt.s32.totalorder %s17, 5
      %p208 = pnand %p206, %p207
      %p209 = pneg %p208
      // Predicated region
      $region37: #{s_gnn_forward.1} parent=5 // pred_check
        _
      $region38: #{s_gnn_forward.1} parent=5 // pred_check_branch
        %211 = sbr.rel (%p208) target = $region40
      $region39: #{s_gnn_forward.1} parent=5 // pred_region
        %s212 = ssub.s32 %s17, 1
        %s213 = sand.u32 %s30, 1
        %s214 = scalar_lea.sflag [#allocation3], %s213
        %s215 = sand.u32 %s30, 1
        %s216 = smul.addr %s215, 64
        %s217 = scalar_lea.vmem [#allocation2], %s216
        // Predicated region
        $region41: #{s_gnn_forward.1} parent=39 // pred_check
          %p218 = pneg %p43
        $region42: #{s_gnn_forward.1} parent=39 // pred_check_branch
          %220 = sbr.rel (%p218) target = $region44
        $region43: #{s_gnn_forward.1} parent=39 // pred_region
          %221 = dma.done %s214, 1024
        $region44: #{s_gnn_forward.1} parent=39 // pred_fallthru
          _
        %s222 = sand.u32 %s30, 1
        %s223 = scalar_lea.sflag [#allocation3], %s222
        %s224 = sand.u32 %s30, 1
        %s225 = smul.addr %s224, 64
        %s226 = scalar_lea.vmem [#allocation2], %s225
        %p227 = pneg %p43
        %p228 = pneg %p40
        %p229 = pneg %p64
        %p230 = pneg %p61
        %p231 = pneg %p85
        %p232 = pneg %p82
        %p233 = pneg %p106
        %p234 = pneg %p103
        %p235 = pneg %p127
        %p236 = pneg %p124
        %p237 = pneg %p153
        %p238 = pneg %p150
        %s239 = sand.u32 %s140, 1
        %s240 = scalar_lea.sflag [#allocation4], %s239
        %s241 = sand.u32 %s140, 1
        %s242 = smul.addr %s241, 64
        %s243 = scalar_lea.vmem [#allocation5], %s242
        %s244 = smul.u32 4, %s22
        %s245 = smul.u32 4, %s22
        %v246 = vld [vmem:[%s217] sm:$0xff]
        %v247 = vld [vmem:[%s217 + $0x8] sm:$0xff]
        %v248 = vld [vmem:[%s217 + $0x10] sm:$0xff]
        %v249 = vld [vmem:[%s217 + $0x18] sm:$0xff]
        %v250 = vld [vmem:[%s217 + $0x20] sm:$0xff]
        %v251 = vld [vmem:[%s217 + $0x28] sm:$0xff]
        %v252 = vld [vmem:[%s217 + $0x30] sm:$0xff]
        %v253 = vld [vmem:[%s217 + $0x38] sm:$0xff]
        %v254 = vld [vmem:[%s1] sm:$0xff]
        %v255 = vld [vmem:[%s1 + $0x8] sm:$0xff]
        %v256 = vld [vmem:[%s1 + $0x10] sm:$0xff]
        %v257 = vld [vmem:[%s1 + $0x18] sm:$0xff]
        %vm258 = vcmask 261120
        %v260 = vsel %vm258, %v246, 0
        %v263 = vsel %vm258, %v247, 0
        %v266 = vsel %vm258, %v248, 0
        %v269 = vsel %vm258, %v249, 0
        %v272 = vsel %vm258, %v250, 0
        %v275 = vsel %vm258, %v251, 0
        %v278 = vsel %vm258, %v252, 0
        %v281 = vsel %vm258, %v253, 0
        %283 = vmatprep.subr.mxu0 0.0
        %284 = vmatpush1.msra.mxu0 0.0
        %285 = vmatprep.subr.mxu0 0.0
        %286 = vmatpush1.msra.mxu0 0.0
        %287 = vmatprep.subr.mxu0 0.0
        %288 = vmatpush1.msra.mxu0 0.0
        %289 = vmatprep.subr.mxu0 0.0
        %290 = vmatpush1.msra.mxu0 0.0
        %291 = vmatprep.subr.mxu0 0.0
        %292 = vmatpush1.msra.mxu0 0.0
        %293 = vmatprep.subr.mxu0 0.0
        %294 = vmatpush1.msra.mxu0 0.0
        %295 = vmatprep.subr.mxu0 0.0
        %296 = vmatpush1.msra.mxu0 0.0
        %297 = vmatprep.subr.mxu0 0.0
        %298 = vmatpush1.msra.mxu0 0.0
        %299 = vmatprep.subr.mxu0 0.0
        %300 = vmatpush1.msra.mxu0 0.0
        %301 = vmatprep.subr.mxu0 0.0
        %302 = vmatpush1.msra.mxu0 0.0
        %303 = vmatprep.subr.mxu0 0.0
        %304 = vmatpush1.msra.mxu0 0.0
        %305 = vmatprep.subr.mxu0 0.0
        %306 = vmatpush1.msra.mxu0 0.0
        %307 = vmatprep.subr.mxu0 0.0
        %308 = vmatpush1.msra.mxu0 %v257
        %309 = vmatprep.subr.mxu0 0.0
        %310 = vmatpush1.msra.mxu0 %v256
        %311 = vmatprep.subr.mxu0 0.0
        %312 = vmatpush1.msra.mxu0 %v255
        %313 = vmatprep.subr.mxu0 0.0
        %314 = vmatpush1.msra.mxu0 %v254
        %315 = vmatprep.subr.mxu0 0.0
        %316 = vmatpush2.msra.mxu0 0.0
        %317 = vmatprep.subr.mxu0 0.0
        %318 = vmatpush2.msra.mxu0 0.0
        %319 = vmatprep.subr.mxu0 0.0
        %320 = vmatpush2.msra.mxu0 0.0
        %321 = vmatprep.subr.mxu0 0.0
        %322 = vmatpush2.msra.mxu0 0.0
        %323 = vmatprep.subr.mxu0 0.0
        %324 = vmatpush2.msra.mxu0 0.0
        %325 = vmatprep.subr.mxu0 0.0
        %326 = vmatpush2.msra.mxu0 0.0
        %327 = vmatprep.subr.mxu0 0.0
        %328 = vmatpush2.msra.mxu0 0.0
        %329 = vmatprep.subr.mxu0 0.0
        %330 = vmatpush2.msra.mxu0 0.0
        %331 = vmatprep.subr.mxu0 0.0
        %332 = vmatpush2.msra.mxu0 0.0
        %333 = vmatprep.subr.mxu0 0.0
        %334 = vmatpush2.msra.mxu0 0.0
        %335 = vmatprep.subr.mxu0 0.0
        %336 = vmatpush2.msra.mxu0 0.0
        %337 = vmatprep.subr.mxu0 0.0
        %338 = vmatpush2.msra.mxu0 0.0
        %339 = vmatprep.subr.mxu0 0.0
        %340 = vmatpush2.msra.mxu0 0.0
        %341 = vmatprep.subr.mxu0 0.0
        %342 = vmatpush2.msra.mxu0 0.0
        %343 = vmatprep.subr.mxu0 0.0
        %344 = vmatpush2.msra.mxu0 0.0
        %345 = vmatprep.subr.mxu0 0.0
        %346 = vmatpush2.msra.mxu0 0.0
        %347 = vmatprep.mubr.f32.mxu0 0.0
        %348 = vmatmul.mubr.f32.gmra.mxu0 %v260
        %v349 = vpop.f32.mrf.mxu0
        %v350 = vadd.f32 0.0, %v349
        %v351 = vpop.f32.mrf.mxu0
        %352 = vmatprep.mubr.f32.mxu0 0.0
        %353 = vmatmul.mubr.f32.gmra.mxu0 %v263
        %v354 = vpop.f32.mrf.mxu0
        %v355 = vadd.f32 0.0, %v354
        %v356 = vpop.f32.mrf.mxu0
        %357 = vmatprep.mubr.f32.mxu0 0.0
        %358 = vmatmul.mubr.f32.gmra.mxu0 %v266
        %v359 = vpop.f32.mrf.mxu0
        %v360 = vadd.f32 0.0, %v359
        %v361 = vpop.f32.mrf.mxu0
        %362 = vmatprep.mubr.f32.mxu0 0.0
        %363 = vmatmul.mubr.f32.gmra.mxu0 %v269
        %v364 = vpop.f32.mrf.mxu0
        %v365 = vadd.f32 0.0, %v364
        %v366 = vpop.f32.mrf.mxu0
        %367 = vmatprep.mubr.f32.mxu0 0.0
        %368 = vmatmul.mubr.f32.gmra.mxu0 %v272
        %v369 = vpop.f32.mrf.mxu0
        %v370 = vadd.f32 0.0, %v369
        %v371 = vpop.f32.mrf.mxu0
        %372 = vmatprep.mubr.f32.mxu0 0.0
        %373 = vmatmul.mubr.f32.gmra.mxu0 %v275
        %v374 = vpop.f32.mrf.mxu0
        %v375 = vadd.f32 0.0, %v374
        %v376 = vpop.f32.mrf.mxu0
        %377 = vmatprep.mubr.f32.mxu0 0.0
        %378 = vmatmul.mubr.f32.gmra.mxu0 %v278
        %v379 = vpop.f32.mrf.mxu0
        %v380 = vadd.f32 0.0, %v379
        %v381 = vpop.f32.mrf.mxu0
        %382 = vmatprep.mubr.f32.mxu0 0.0
        %383 = vmatmul.mubr.f32.gmra.mxu0 %v281
        %v384 = vpop.f32.mrf.mxu0
        %v385 = vadd.f32 0.0, %v384
        %v386 = vpop.f32.mrf.mxu0
        %387 = vdwg.mxu0
        %v388 = vld [vmem:[%s2] sm:$0xff]
        %v389 = vld [vmem:[%s2 + $0x8] sm:$0xff]
        %v390 = vld [vmem:[%s2 + $0x10] sm:$0xff]
        %v391 = vld [vmem:[%s2 + $0x18] sm:$0xff]
        %v393 = vsel %vm258, %v350, 0
        %v396 = vsel %vm258, %v355, 0
        %v399 = vsel %vm258, %v360, 0
        %v402 = vsel %vm258, %v365, 0
        %v405 = vsel %vm258, %v370, 0
        %v408 = vsel %vm258, %v375, 0
        %v411 = vsel %vm258, %v380, 0
        %v414 = vsel %vm258, %v385, 0
        %416 = vmatprep.subr.mxu0 0.0
        %417 = vmatpush1.msra.mxu0 0.0
        %418 = vmatprep.subr.mxu0 0.0
        %419 = vmatpush1.msra.mxu0 0.0
        %420 = vmatprep.subr.mxu0 0.0
        %421 = vmatpush1.msra.mxu0 0.0
        %422 = vmatprep.subr.mxu0 0.0
        %423 = vmatpush1.msra.mxu0 0.0
        %424 = vmatprep.subr.mxu0 0.0
        %425 = vmatpush1.msra.mxu0 0.0
        %426 = vmatprep.subr.mxu0 0.0
        %427 = vmatpush1.msra.mxu0 0.0
        %428 = vmatprep.subr.mxu0 0.0
        %429 = vmatpush1.msra.mxu0 0.0
        %430 = vmatprep.subr.mxu0 0.0
        %431 = vmatpush1.msra.mxu0 0.0
        %432 = vmatprep.subr.mxu0 0.0
        %433 = vmatpush1.msra.mxu0 0.0
        %434 = vmatprep.subr.mxu0 0.0
        %435 = vmatpush1.msra.mxu0 0.0
        %436 = vmatprep.subr.mxu0 0.0
        %437 = vmatpush1.msra.mxu0 0.0
        %438 = vmatprep.subr.mxu0 0.0
        %439 = vmatpush1.msra.mxu0 0.0
        %440 = vmatprep.subr.mxu0 0.0
        %441 = vmatpush1.msra.mxu0 %v391
        %442 = vmatprep.subr.mxu0 0.0
        %443 = vmatpush1.msra.mxu0 %v390
        %444 = vmatprep.subr.mxu0 0.0
        %445 = vmatpush1.msra.mxu0 %v389
        %446 = vmatprep.subr.mxu0 0.0
        %447 = vmatpush1.msra.mxu0 %v388
        %448 = vmatprep.subr.mxu0 0.0
        %449 = vmatpush2.msra.mxu0 0.0
        %450 = vmatprep.subr.mxu0 0.0
        %451 = vmatpush2.msra.mxu0 0.0
        %452 = vmatprep.subr.mxu0 0.0
        %453 = vmatpush2.msra.mxu0 0.0
        %454 = vmatprep.subr.mxu0 0.0
        %455 = vmatpush2.msra.mxu0 0.0
        %456 = vmatprep.subr.mxu0 0.0
        %457 = vmatpush2.msra.mxu0 0.0
        %458 = vmatprep.subr.mxu0 0.0
        %459 = vmatpush2.msra.mxu0 0.0
        %460 = vmatprep.subr.mxu0 0.0
        %461 = vmatpush2.msra.mxu0 0.0
        %462 = vmatprep.subr.mxu0 0.0
        %463 = vmatpush2.msra.mxu0 0.0
        %464 = vmatprep.subr.mxu0 0.0
        %465 = vmatpush2.msra.mxu0 0.0
        %466 = vmatprep.subr.mxu0 0.0
        %467 = vmatpush2.msra.mxu0 0.0
        %468 = vmatprep.subr.mxu0 0.0
        %469 = vmatpush2.msra.mxu0 0.0
        %470 = vmatprep.subr.mxu0 0.0
        %471 = vmatpush2.msra.mxu0 0.0
        %472 = vmatprep.subr.mxu0 0.0
        %473 = vmatpush2.msra.mxu0 0.0
        %474 = vmatprep.subr.mxu0 0.0
        %475 = vmatpush2.msra.mxu0 0.0
        %476 = vmatprep.subr.mxu0 0.0
        %477 = vmatpush2.msra.mxu0 0.0
        %478 = vmatprep.subr.mxu0 0.0
        %479 = vmatpush2.msra.mxu0 0.0
        %480 = vmatprep.mubr.f32.mxu0 0.0
        %481 = vmatmul.mubr.f32.gmra.mxu0 %v393
        %v482 = vpop.f32.mrf.mxu0
        %v483 = vadd.f32 0.0, %v482
        %v484 = vpop.f32.mrf.mxu0
        %485 = vmatprep.mubr.f32.mxu0 0.0
        %486 = vmatmul.mubr.f32.gmra.mxu0 %v396
        %v487 = vpop.f32.mrf.mxu0
        %v488 = vadd.f32 0.0, %v487
        %v489 = vpop.f32.mrf.mxu0
        %490 = vmatprep.mubr.f32.mxu0 0.0
        %491 = vmatmul.mubr.f32.gmra.mxu0 %v399
        %v492 = vpop.f32.mrf.mxu0
        %v493 = vadd.f32 0.0, %v492
        %v494 = vpop.f32.mrf.mxu0
        %495 = vmatprep.mubr.f32.mxu0 0.0
        %496 = vmatmul.mubr.f32.gmra.mxu0 %v402
        %v497 = vpop.f32.mrf.mxu0
        %v498 = vadd.f32 0.0, %v497
        %v499 = vpop.f32.mrf.mxu0
        %500 = vmatprep.mubr.f32.mxu0 0.0
        %501 = vmatmul.mubr.f32.gmra.mxu0 %v405
        %v502 = vpop.f32.mrf.mxu0
        %v503 = vadd.f32 0.0, %v502
        %v504 = vpop.f32.mrf.mxu0
        %505 = vmatprep.mubr.f32.mxu0 0.0
        %506 = vmatmul.mubr.f32.gmra.mxu0 %v408
        %v507 = vpop.f32.mrf.mxu0
        %v508 = vadd.f32 0.0, %v507
        %v509 = vpop.f32.mrf.mxu0
        %510 = vmatprep.mubr.f32.mxu0 0.0
        %511 = vmatmul.mubr.f32.gmra.mxu0 %v411
        %v512 = vpop.f32.mrf.mxu0
        %v513 = vadd.f32 0.0, %v512
        %v514 = vpop.f32.mrf.mxu0
        %515 = vmatprep.mubr.f32.mxu0 0.0
        %516 = vmatmul.mubr.f32.gmra.mxu0 %v414
        %v517 = vpop.f32.mrf.mxu0
        %v518 = vadd.f32 0.0, %v517
        %v519 = vpop.f32.mrf.mxu0
        %520 = vdwg.mxu0
        %vm521 = vcmask 130048
        %v523 = vsel %vm521, %v483, 0
        %v526 = vsel %vm521, %v488, 0
        %528 = vmatprep.subr.mxu0 0.0
        %529 = vmatpush1.xpose.msra.mxu0 0.0
        %530 = vmatprep.subr.mxu0 0.0
        %531 = vmatpush1.xpose.msra.mxu0 0.0
        %532 = vmatprep.subr.mxu0 0.0
        %533 = vmatpush1.xpose.msra.mxu0 0.0
        %534 = vmatprep.subr.mxu0 0.0
        %535 = vmatpush1.xpose.msra.mxu0 0.0
        %536 = vmatprep.subr.mxu0 0.0
        %537 = vmatpush1.xpose.msra.mxu0 0.0
        %538 = vmatprep.subr.mxu0 0.0
        %539 = vmatpush1.xpose.msra.mxu0 0.0
        %540 = vmatprep.subr.mxu0 0.0
        %541 = vmatpush1.xpose.msra.mxu0 0.0
        %542 = vmatprep.subr.mxu0 0.0
        %543 = vmatpush1.xpose.msra.mxu0 0.0
        %544 = vmatprep.subr.mxu0 0.0
        %545 = vmatpush1.xpose.msra.mxu0 0.0
        %546 = vmatprep.subr.mxu0 0.0
        %547 = vmatpush1.xpose.msra.mxu0 0.0
        %548 = vmatprep.subr.mxu0 0.0
        %549 = vmatpush1.xpose.msra.mxu0 0.0
        %550 = vmatprep.subr.mxu0 0.0
        %551 = vmatpush1.xpose.msra.mxu0 0.0
        %552 = vmatprep.subr.mxu0 0.0
        %553 = vmatpush1.xpose.msra.mxu0 0.0
        %554 = vmatprep.subr.mxu0 0.0
        %555 = vmatpush1.xpose.msra.mxu0 0.0
        %556 = vmatprep.subr.mxu0 0.0
        %557 = vmatpush1.xpose.msra.mxu0 %v526
        %558 = vmatprep.subr.mxu0 0.0
        %559 = vmatpush1.xpose.msra.mxu0 %v523
        %560 = vmatprep.subr.mxu0 0.0
        %561 = vmatpush2.xpose.msra.mxu0 0.0
        %562 = vmatprep.subr.mxu0 0.0
        %563 = vmatpush2.xpose.msra.mxu0 0.0
        %564 = vmatprep.subr.mxu0 0.0
        %565 = vmatpush2.xpose.msra.mxu0 0.0
        %566 = vmatprep.subr.mxu0 0.0
        %567 = vmatpush2.xpose.msra.mxu0 0.0
        %568 = vmatprep.subr.mxu0 0.0
        %569 = vmatpush2.xpose.msra.mxu0 0.0
        %570 = vmatprep.subr.mxu0 0.0
        %571 = vmatpush2.xpose.msra.mxu0 0.0
        %572 = vmatprep.subr.mxu0 0.0
        %573 = vmatpush2.xpose.msra.mxu0 0.0
        %574 = vmatprep.subr.mxu0 0.0
        %575 = vmatpush2.xpose.msra.mxu0 0.0
        %576 = vmatprep.subr.mxu0 0.0
        %577 = vmatpush2.xpose.msra.mxu0 0.0
        %578 = vmatprep.subr.mxu0 0.0
        %579 = vmatpush2.xpose.msra.mxu0 0.0
        %580 = vmatprep.subr.mxu0 0.0
        %581 = vmatpush2.xpose.msra.mxu0 0.0
        %582 = vmatprep.subr.mxu0 0.0
        %583 = vmatpush2.xpose.msra.mxu0 0.0
        %584 = vmatprep.subr.mxu0 0.0
        %585 = vmatpush2.xpose.msra.mxu0 0.0
        %586 = vmatprep.subr.mxu0 0.0
        %587 = vmatpush2.xpose.msra.mxu0 0.0
        %588 = vmatprep.subr.mxu0 0.0
        %589 = vmatpush2.xpose.msra.mxu0 0.0
        %590 = vmatprep.subr.mxu0 0.0
        %591 = vmatpush2.xpose.msra.mxu0 0.0
        %592 = vmatprep.mubr.f32.mxu0 0.0
        %593 = vmatmul.mubr.f32.gmra.mxu0 %v523
        %v594 = vpop.f32.mrf.mxu0
        %v595 = vadd.f32 0.0, %v594
        %v596 = vpop.f32.mrf.mxu0
        %597 = vmatprep.mubr.f32.mxu0 0.0
        %598 = vmatmul.mubr.f32.gmra.mxu0 %v526
        %v599 = vpop.f32.mrf.mxu0
        %v600 = vadd.f32 0.0, %v599
        %v601 = vpop.f32.mrf.mxu0
        %602 = vdwg.mxu0
        %v604 = vsel %vm521, %v493, 0
        %v607 = vsel %vm521, %v498, 0
        %609 = vmatprep.subr.mxu0 0.0
        %610 = vmatpush1.xpose.msra.mxu0 0.0
        %611 = vmatprep.subr.mxu0 0.0
        %612 = vmatpush1.xpose.msra.mxu0 0.0
        %613 = vmatprep.subr.mxu0 0.0
        %614 = vmatpush1.xpose.msra.mxu0 0.0
        %615 = vmatprep.subr.mxu0 0.0
        %616 = vmatpush1.xpose.msra.mxu0 0.0
        %617 = vmatprep.subr.mxu0 0.0
        %618 = vmatpush1.xpose.msra.mxu0 0.0
        %619 = vmatprep.subr.mxu0 0.0
        %620 = vmatpush1.xpose.msra.mxu0 0.0
        %621 = vmatprep.subr.mxu0 0.0
        %622 = vmatpush1.xpose.msra.mxu0 0.0
        %623 = vmatprep.subr.mxu0 0.0
        %624 = vmatpush1.xpose.msra.mxu0 0.0
        %625 = vmatprep.subr.mxu0 0.0
        %626 = vmatpush1.xpose.msra.mxu0 0.0
        %627 = vmatprep.subr.mxu0 0.0
        %628 = vmatpush1.xpose.msra.mxu0 0.0
        %629 = vmatprep.subr.mxu0 0.0
        %630 = vmatpush1.xpose.msra.mxu0 0.0
        %631 = vmatprep.subr.mxu0 0.0
        %632 = vmatpush1.xpose.msra.mxu0 0.0
        %633 = vmatprep.subr.mxu0 0.0
        %634 = vmatpush1.xpose.msra.mxu0 0.0
        %635 = vmatprep.subr.mxu0 0.0
        %636 = vmatpush1.xpose.msra.mxu0 0.0
        %637 = vmatprep.subr.mxu0 0.0
        %638 = vmatpush1.xpose.msra.mxu0 %v607
        %639 = vmatprep.subr.mxu0 0.0
        %640 = vmatpush1.xpose.msra.mxu0 %v604
        %641 = vmatprep.subr.mxu0 0.0
        %642 = vmatpush2.xpose.msra.mxu0 0.0
        %643 = vmatprep.subr.mxu0 0.0
        %644 = vmatpush2.xpose.msra.mxu0 0.0
        %645 = vmatprep.subr.mxu0 0.0
        %646 = vmatpush2.xpose.msra.mxu0 0.0
        %647 = vmatprep.subr.mxu0 0.0
        %648 = vmatpush2.xpose.msra.mxu0 0.0
        %649 = vmatprep.subr.mxu0 0.0
        %650 = vmatpush2.xpose.msra.mxu0 0.0
        %651 = vmatprep.subr.mxu0 0.0
        %652 = vmatpush2.xpose.msra.mxu0 0.0
        %653 = vmatprep.subr.mxu0 0.0
        %654 = vmatpush2.xpose.msra.mxu0 0.0
        %655 = vmatprep.subr.mxu0 0.0
        %656 = vmatpush2.xpose.msra.mxu0 0.0
        %657 = vmatprep.subr.mxu0 0.0
        %658 = vmatpush2.xpose.msra.mxu0 0.0
        %659 = vmatprep.subr.mxu0 0.0
        %660 = vmatpush2.xpose.msra.mxu0 0.0
        %661 = vmatprep.subr.mxu0 0.0
        %662 = vmatpush2.xpose.msra.mxu0 0.0
        %663 = vmatprep.subr.mxu0 0.0
        %664 = vmatpush2.xpose.msra.mxu0 0.0
        %665 = vmatprep.subr.mxu0 0.0
        %666 = vmatpush2.xpose.msra.mxu0 0.0
        %667 = vmatprep.subr.mxu0 0.0
        %668 = vmatpush2.xpose.msra.mxu0 0.0
        %669 = vmatprep.subr.mxu0 0.0
        %670 = vmatpush2.xpose.msra.mxu0 0.0
        %671 = vmatprep.subr.mxu0 0.0
        %672 = vmatpush2.xpose.msra.mxu0 0.0
        %673 = vmatprep.mubr.f32.mxu0 0.0
        %674 = vmatmul.mubr.f32.gmra.mxu0 %v604
        %v675 = vpop.f32.mrf.mxu0
        %v676 = vadd.f32 0.0, %v675
        %v677 = vpop.f32.mrf.mxu0
        %678 = vmatprep.mubr.f32.mxu0 0.0
        %679 = vmatmul.mubr.f32.gmra.mxu0 %v607
        %v680 = vpop.f32.mrf.mxu0
        %v681 = vadd.f32 0.0, %v680
        %v682 = vpop.f32.mrf.mxu0
        %683 = vdwg.mxu0
        %v685 = vsel %vm521, %v503, 0
        %v688 = vsel %vm521, %v508, 0
        %690 = vmatprep.subr.mxu0 0.0
        %691 = vmatpush1.xpose.msra.mxu0 0.0
        %692 = vmatprep.subr.mxu0 0.0
        %693 = vmatpush1.xpose.msra.mxu0 0.0
        %694 = vmatprep.subr.mxu0 0.0
        %695 = vmatpush1.xpose.msra.mxu0 0.0
        %696 = vmatprep.subr.mxu0 0.0
        %697 = vmatpush1.xpose.msra.mxu0 0.0
        %698 = vmatprep.subr.mxu0 0.0
        %699 = vmatpush1.xpose.msra.mxu0 0.0
        %700 = vmatprep.subr.mxu0 0.0
        %701 = vmatpush1.xpose.msra.mxu0 0.0
        %702 = vmatprep.subr.mxu0 0.0
        %703 = vmatpush1.xpose.msra.mxu0 0.0
        %704 = vmatprep.subr.mxu0 0.0
        %705 = vmatpush1.xpose.msra.mxu0 0.0
        %706 = vmatprep.subr.mxu0 0.0
        %707 = vmatpush1.xpose.msra.mxu0 0.0
        %708 = vmatprep.subr.mxu0 0.0
        %709 = vmatpush1.xpose.msra.mxu0 0.0
        %710 = vmatprep.subr.mxu0 0.0
        %711 = vmatpush1.xpose.msra.mxu0 0.0
        %712 = vmatprep.subr.mxu0 0.0
        %713 = vmatpush1.xpose.msra.mxu0 0.0
        %714 = vmatprep.subr.mxu0 0.0
        %715 = vmatpush1.xpose.msra.mxu0 0.0
        %716 = vmatprep.subr.mxu0 0.0
        %717 = vmatpush1.xpose.msra.mxu0 0.0
        %718 = vmatprep.subr.mxu0 0.0
        %719 = vmatpush1.xpose.msra.mxu0 %v688
        %720 = vmatprep.subr.mxu0 0.0
        %721 = vmatpush1.xpose.msra.mxu0 %v685
        %722 = vmatprep.subr.mxu0 0.0
        %723 = vmatpush2.xpose.msra.mxu0 0.0
        %724 = vmatprep.subr.mxu0 0.0
        %725 = vmatpush2.xpose.msra.mxu0 0.0
        %726 = vmatprep.subr.mxu0 0.0
        %727 = vmatpush2.xpose.msra.mxu0 0.0
        %728 = vmatprep.subr.mxu0 0.0
        %729 = vmatpush2.xpose.msra.mxu0 0.0
        %730 = vmatprep.subr.mxu0 0.0
        %731 = vmatpush2.xpose.msra.mxu0 0.0
        %732 = vmatprep.subr.mxu0 0.0
        %733 = vmatpush2.xpose.msra.mxu0 0.0
        %734 = vmatprep.subr.mxu0 0.0
        %735 = vmatpush2.xpose.msra.mxu0 0.0
        %736 = vmatprep.subr.mxu0 0.0
        %737 = vmatpush2.xpose.msra.mxu0 0.0
        %738 = vmatprep.subr.mxu0 0.0
        %739 = vmatpush2.xpose.msra.mxu0 0.0
        %740 = vmatprep.subr.mxu0 0.0
        %741 = vmatpush2.xpose.msra.mxu0 0.0
        %742 = vmatprep.subr.mxu0 0.0
        %743 = vmatpush2.xpose.msra.mxu0 0.0
        %744 = vmatprep.subr.mxu0 0.0
        %745 = vmatpush2.xpose.msra.mxu0 0.0
        %746 = vmatprep.subr.mxu0 0.0
        %747 = vmatpush2.xpose.msra.mxu0 0.0
        %748 = vmatprep.subr.mxu0 0.0
        %749 = vmatpush2.xpose.msra.mxu0 0.0
        %750 = vmatprep.subr.mxu0 0.0
        %751 = vmatpush2.xpose.msra.mxu0 0.0
        %752 = vmatprep.subr.mxu0 0.0
        %753 = vmatpush2.xpose.msra.mxu0 0.0
        %754 = vmatprep.mubr.f32.mxu0 0.0
        %755 = vmatmul.mubr.f32.gmra.mxu0 %v685
        %v756 = vpop.f32.mrf.mxu0
        %v757 = vadd.f32 0.0, %v756
        %v758 = vpop.f32.mrf.mxu0
        %759 = vmatprep.mubr.f32.mxu0 0.0
        %760 = vmatmul.mubr.f32.gmra.mxu0 %v688
        %v761 = vpop.f32.mrf.mxu0
        %v762 = vadd.f32 0.0, %v761
        %v763 = vpop.f32.mrf.mxu0
        %764 = vdwg.mxu0
        %v766 = vsel %vm521, %v513, 0
        %v769 = vsel %vm521, %v518, 0
        %771 = vmatprep.subr.mxu0 0.0
        %772 = vmatpush1.xpose.msra.mxu0 0.0
        %773 = vmatprep.subr.mxu0 0.0
        %774 = vmatpush1.xpose.msra.mxu0 0.0
        %775 = vmatprep.subr.mxu0 0.0
        %776 = vmatpush1.xpose.msra.mxu0 0.0
        %777 = vmatprep.subr.mxu0 0.0
        %778 = vmatpush1.xpose.msra.mxu0 0.0
        %779 = vmatprep.subr.mxu0 0.0
        %780 = vmatpush1.xpose.msra.mxu0 0.0
        %781 = vmatprep.subr.mxu0 0.0
        %782 = vmatpush1.xpose.msra.mxu0 0.0
        %783 = vmatprep.subr.mxu0 0.0
        %784 = vmatpush1.xpose.msra.mxu0 0.0
        %785 = vmatprep.subr.mxu0 0.0
        %786 = vmatpush1.xpose.msra.mxu0 0.0
        %787 = vmatprep.subr.mxu0 0.0
        %788 = vmatpush1.xpose.msra.mxu0 0.0
        %789 = vmatprep.subr.mxu0 0.0
        %790 = vmatpush1.xpose.msra.mxu0 0.0
        %791 = vmatprep.subr.mxu0 0.0
        %792 = vmatpush1.xpose.msra.mxu0 0.0
        %793 = vmatprep.subr.mxu0 0.0
        %794 = vmatpush1.xpose.msra.mxu0 0.0
        %795 = vmatprep.subr.mxu0 0.0
        %796 = vmatpush1.xpose.msra.mxu0 0.0
        %797 = vmatprep.subr.mxu0 0.0
        %798 = vmatpush1.xpose.msra.mxu0 0.0
        %799 = vmatprep.subr.mxu0 0.0
        %800 = vmatpush1.xpose.msra.mxu0 %v769
        %801 = vmatprep.subr.mxu0 0.0
        %802 = vmatpush1.xpose.msra.mxu0 %v766
        %803 = vmatprep.subr.mxu0 0.0
        %804 = vmatpush2.xpose.msra.mxu0 0.0
        %805 = vmatprep.subr.mxu0 0.0
        %806 = vmatpush2.xpose.msra.mxu0 0.0
        %807 = vmatprep.subr.mxu0 0.0
        %808 = vmatpush2.xpose.msra.mxu0 0.0
        %809 = vmatprep.subr.mxu0 0.0
        %810 = vmatpush2.xpose.msra.mxu0 0.0
        %811 = vmatprep.subr.mxu0 0.0
        %812 = vmatpush2.xpose.msra.mxu0 0.0
        %813 = vmatprep.subr.mxu0 0.0
        %814 = vmatpush2.xpose.msra.mxu0 0.0
        %815 = vmatprep.subr.mxu0 0.0
        %816 = vmatpush2.xpose.msra.mxu0 0.0
        %817 = vmatprep.subr.mxu0 0.0
        %818 = vmatpush2.xpose.msra.mxu0 0.0
        %819 = vmatprep.subr.mxu0 0.0
        %820 = vmatpush2.xpose.msra.mxu0 0.0
        %821 = vmatprep.subr.mxu0 0.0
        %822 = vmatpush2.xpose.msra.mxu0 0.0
        %823 = vmatprep.subr.mxu0 0.0
        %824 = vmatpush2.xpose.msra.mxu0 0.0
        %825 = vmatprep.subr.mxu0 0.0
        %826 = vmatpush2.xpose.msra.mxu0 0.0
        %827 = vmatprep.subr.mxu0 0.0
        %828 = vmatpush2.xpose.msra.mxu0 0.0
        %829 = vmatprep.subr.mxu0 0.0
        %830 = vmatpush2.xpose.msra.mxu0 0.0
        %831 = vmatprep.subr.mxu0 0.0
        %832 = vmatpush2.xpose.msra.mxu0 0.0
        %833 = vmatprep.subr.mxu0 0.0
        %834 = vmatpush2.xpose.msra.mxu0 0.0
        %835 = vmatprep.mubr.f32.mxu0 0.0
        %836 = vmatmul.mubr.f32.gmra.mxu0 %v766
        %v837 = vpop.f32.mrf.mxu0
        %v838 = vadd.f32 0.0, %v837
        %v839 = vpop.f32.mrf.mxu0
        %840 = vmatprep.mubr.f32.mxu0 0.0
        %841 = vmatmul.mubr.f32.gmra.mxu0 %v769
        %v842 = vpop.f32.mrf.mxu0
        %v843 = vadd.f32 0.0, %v842
        %v844 = vpop.f32.mrf.mxu0
        %845 = vdwg.mxu0
        %v846 = vsel %vm521, %v595, -inf
        %847 = vmax.xlane.f32.xlu0 %v846
        %v848 = vpop.xlane.xlu0 %847
        %v849 = vsel %vm521, %v600, -inf
        %850 = vmax.xlane.f32.xlu0 %v849
        %v851 = vpop.xlane.xlu0 %850
        %v852 = vsel %vm521, %v676, -inf
        %853 = vmax.xlane.f32.xlu0 %v852
        %v854 = vpop.xlane.xlu0 %853
        %v855 = vsel %vm521, %v681, -inf
        %856 = vmax.xlane.f32.xlu0 %v855
        %v857 = vpop.xlane.xlu0 %856
        %v858 = vsel %vm521, %v757, -inf
        %859 = vmax.xlane.f32.xlu0 %v858
        %v860 = vpop.xlane.xlu0 %859
        %v861 = vsel %vm521, %v762, -inf
        %862 = vmax.xlane.f32.xlu0 %v861
        %v863 = vpop.xlane.xlu0 %862
        %v864 = vsel %vm521, %v838, -inf
        %865 = vmax.xlane.f32.xlu0 %v864
        %v866 = vpop.xlane.xlu0 %865
        %v867 = vsel %vm521, %v843, -inf
        %868 = vmax.xlane.f32.xlu0 %v867
        %v869 = vpop.xlane.xlu0 %868
        %v870 = vsub.f32 %v595, %v848
        %v871 = vsub.f32 %v600, %v851
        %v872 = vsub.f32 %v676, %v854
        %v873 = vsub.f32 %v681, %v857
        %v874 = vsub.f32 %v757, %v860
        %v875 = vsub.f32 %v762, %v863
        %v876 = vsub.f32 %v838, %v866
        %v877 = vsub.f32 %v843, %v869
        %v878 = vmul.f32 %v870, 1.442695
        %v879 = vpow.pop %v878
        %v880 = vmul.f32 %v871, 1.442695
        %v881 = vpow.pop %v880
        %v882 = vmul.f32 %v872, 1.442695
        %v883 = vpow.pop %v882
        %v884 = vmul.f32 %v873, 1.442695
        %v885 = vpow.pop %v884
        %v886 = vmul.f32 %v874, 1.442695
        %v887 = vpow.pop %v886
        %v888 = vmul.f32 %v875, 1.442695
        %v889 = vpow.pop %v888
        %v890 = vmul.f32 %v876, 1.442695
        %v891 = vpow.pop %v890
        %v892 = vmul.f32 %v877, 1.442695
        %v893 = vpow.pop %v892
        %v894 = vsel %vm521, %v879, 0.0
        %895 = vadd.xlane.f32.xlu0 %v894
        %v896 = vpop.xlane.xlu0 %895
        %v897 = vsel %vm521, %v881, 0.0
        %898 = vadd.xlane.f32.xlu0 %v897
        %v899 = vpop.xlane.xlu0 %898
        %v900 = vsel %vm521, %v883, 0.0
        %901 = vadd.xlane.f32.xlu0 %v900
        %v902 = vpop.xlane.xlu0 %901
        %v903 = vsel %vm521, %v885, 0.0
        %904 = vadd.xlane.f32.xlu0 %v903
        %v905 = vpop.xlane.xlu0 %904
        %v906 = vsel %vm521, %v887, 0.0
        %907 = vadd.xlane.f32.xlu0 %v906
        %v908 = vpop.xlane.xlu0 %907
        %v909 = vsel %vm521, %v889, 0.0
        %910 = vadd.xlane.f32.xlu0 %v909
        %v911 = vpop.xlane.xlu0 %910
        %v912 = vsel %vm521, %v891, 0.0
        %913 = vadd.xlane.f32.xlu0 %v912
        %v914 = vpop.xlane.xlu0 %913
        %v915 = vsel %vm521, %v893, 0.0
        %916 = vadd.xlane.f32.xlu0 %v915
        %v917 = vpop.xlane.xlu0 %916
        %v918 = vrcp.pop %v896
        %v919 = vmul.f32 %v879, %v918
        %v920 = vrcp.pop %v899
        %v921 = vmul.f32 %v881, %v920
        %v922 = vrcp.pop %v902
        %v923 = vmul.f32 %v883, %v922
        %v924 = vrcp.pop %v905
        %v925 = vmul.f32 %v885, %v924
        %v926 = vrcp.pop %v908
        %v927 = vmul.f32 %v887, %v926
        %v928 = vrcp.pop %v911
        %v929 = vmul.f32 %v889, %v928
        %v930 = vrcp.pop %v914
        %v931 = vmul.f32 %v891, %v930
        %v932 = vrcp.pop %v917
        %v933 = vmul.f32 %v893, %v932
        %v934 = vlaneseq
        %v935 = vshrl.u32 %v934, 7
        %v936 = vadd.s32 %v935, 8
        %v937 = vlaneseq
        %v938 = vand.u32 %v937, 127
        %vm939 = vcmp.eq.s32.totalorder %v935, %v938
        %vm940 = vcmp.eq.s32.totalorder %v936, %v938
        %v941 = vsel %vm939, 1, 0
        %v942 = vsel %vm940, 1, 0
        %v943 = vcvt.s32.f32 %v941
        %v944 = vcvt.s32.f32 %v942
        %v945 = vld [vmem:[%s4] sm:$0xff]
        %v946 = vld [vmem:[%s4 + $0x8] sm:$0xff]
        %v947 = vmul.f32 %v919, %v945
        %v948 = vmul.f32 %v921, %v946
        %v949 = vmul.f32 %v923, %v945
        %v950 = vmul.f32 %v925, %v946
        %v951 = vmul.f32 %v927, %v945
        %v952 = vmul.f32 %v929, %v946
        %v953 = vmul.f32 %v931, %v945
        %v954 = vmul.f32 %v933, %v946
        %v955 = vadd.f32 %v947, %v943
        %v956 = vadd.f32 %v948, %v944
        %v957 = vadd.f32 %v949, %v943
        %v958 = vadd.f32 %v950, %v944
        %v959 = vadd.f32 %v951, %v943
        %v960 = vadd.f32 %v952, %v944
        %v961 = vadd.f32 %v953, %v943
        %v962 = vadd.f32 %v954, %v944
        %v963 = vsel %vm521, %v955, 0.0
        %964 = vadd.xlane.f32.xlu0 %v963
        %v965 = vpop.xlane.xlu0 %964
        %v966 = vsel %vm521, %v956, 0.0
        %967 = vadd.xlane.f32.xlu0 %v966
        %v968 = vpop.xlane.xlu0 %967
        %v969 = vsel %vm521, %v957, 0.0
        %970 = vadd.xlane.f32.xlu0 %v969
        %v971 = vpop.xlane.xlu0 %970
        %v972 = vsel %vm521, %v958, 0.0
        %973 = vadd.xlane.f32.xlu0 %v972
        %v974 = vpop.xlane.xlu0 %973
        %v975 = vsel %vm521, %v959, 0.0
        %976 = vadd.xlane.f32.xlu0 %v975
        %v977 = vpop.xlane.xlu0 %976
        %v978 = vsel %vm521, %v960, 0.0
        %979 = vadd.xlane.f32.xlu0 %v978
        %v980 = vpop.xlane.xlu0 %979
        %v981 = vsel %vm521, %v961, 0.0
        %982 = vadd.xlane.f32.xlu0 %v981
        %v983 = vpop.xlane.xlu0 %982
        %v984 = vsel %vm521, %v962, 0.0
        %985 = vadd.xlane.f32.xlu0 %v984
        %v986 = vpop.xlane.xlu0 %985
        %v987 = vrsqrt.pop %v965
        %v988 = vrsqrt.pop %v968
        %v989 = vrsqrt.pop %v971
        %v990 = vrsqrt.pop %v974
        %v991 = vrsqrt.pop %v977
        %v992 = vrsqrt.pop %v980
        %v993 = vrsqrt.pop %v983
        %v994 = vrsqrt.pop %v986
        %v995 = vmul.f32 %v246, %v987
        %v996 = vmul.f32 %v247, %v988
        %v997 = vmul.f32 %v248, %v989
        %v998 = vmul.f32 %v249, %v990
        %v999 = vmul.f32 %v250, %v991
        %v1000 = vmul.f32 %v251, %v992
        %v1001 = vmul.f32 %v252, %v993
        %v1002 = vmul.f32 %v253, %v994
        %v1004 = vsel %vm521, %v955, 0
        %v1007 = vsel %vm521, %v956, 0
        %1009 = vmatprep.subr.mxu0 0.0
        %1010 = vmatpush1.msra.mxu0 0.0
        %1011 = vmatprep.subr.mxu0 0.0
        %1012 = vmatpush1.msra.mxu0 0.0
        %1013 = vmatprep.subr.mxu0 0.0
        %1014 = vmatpush1.msra.mxu0 0.0
        %1015 = vmatprep.subr.mxu0 0.0
        %1016 = vmatpush1.msra.mxu0 0.0
        %1017 = vmatprep.subr.mxu0 0.0
        %1018 = vmatpush1.msra.mxu0 0.0
        %1019 = vmatprep.subr.mxu0 0.0
        %1020 = vmatpush1.msra.mxu0 0.0
        %1021 = vmatprep.subr.mxu0 0.0
        %1022 = vmatpush1.msra.mxu0 0.0
        %1023 = vmatprep.subr.mxu0 0.0
        %1024 = vmatpush1.msra.mxu0 0.0
        %1025 = vmatprep.subr.mxu0 0.0
        %1026 = vmatpush1.msra.mxu0 0.0
        %1027 = vmatprep.subr.mxu0 0.0
        %1028 = vmatpush1.msra.mxu0 0.0
        %1029 = vmatprep.subr.mxu0 0.0
        %1030 = vmatpush1.msra.mxu0 0.0
        %1031 = vmatprep.subr.mxu0 0.0
        %1032 = vmatpush1.msra.mxu0 0.0
        %1033 = vmatprep.subr.mxu0 0.0
        %1034 = vmatpush1.msra.mxu0 0.0
        %1035 = vmatprep.subr.mxu0 0.0
        %1036 = vmatpush1.msra.mxu0 0.0
        %1037 = vmatprep.subr.mxu0 0.0
        %1038 = vmatpush1.msra.mxu0 %v996
        %1039 = vmatprep.subr.mxu0 0.0
        %1040 = vmatpush1.msra.mxu0 %v995
        %1041 = vmatprep.subr.mxu0 0.0
        %1042 = vmatpush2.msra.mxu0 0.0
        %1043 = vmatprep.subr.mxu0 0.0
        %1044 = vmatpush2.msra.mxu0 0.0
        %1045 = vmatprep.subr.mxu0 0.0
        %1046 = vmatpush2.msra.mxu0 0.0
        %1047 = vmatprep.subr.mxu0 0.0
        %1048 = vmatpush2.msra.mxu0 0.0
        %1049 = vmatprep.subr.mxu0 0.0
        %1050 = vmatpush2.msra.mxu0 0.0
        %1051 = vmatprep.subr.mxu0 0.0
        %1052 = vmatpush2.msra.mxu0 0.0
        %1053 = vmatprep.subr.mxu0 0.0
        %1054 = vmatpush2.msra.mxu0 0.0
        %1055 = vmatprep.subr.mxu0 0.0
        %1056 = vmatpush2.msra.mxu0 0.0
        %1057 = vmatprep.subr.mxu0 0.0
        %1058 = vmatpush2.msra.mxu0 0.0
        %1059 = vmatprep.subr.mxu0 0.0
        %1060 = vmatpush2.msra.mxu0 0.0
        %1061 = vmatprep.subr.mxu0 0.0
        %1062 = vmatpush2.msra.mxu0 0.0
        %1063 = vmatprep.subr.mxu0 0.0
        %1064 = vmatpush2.msra.mxu0 0.0
        %1065 = vmatprep.subr.mxu0 0.0
        %1066 = vmatpush2.msra.mxu0 0.0
        %1067 = vmatprep.subr.mxu0 0.0
        %1068 = vmatpush2.msra.mxu0 0.0
        %1069 = vmatprep.subr.mxu0 0.0
        %1070 = vmatpush2.msra.mxu0 0.0
        %1071 = vmatprep.subr.mxu0 0.0
        %1072 = vmatpush2.msra.mxu0 0.0
        %1073 = vmatprep.mubr.f32.mxu0 0.0
        %1074 = vmatmul.mubr.f32.gmra.mxu0 %v1004
        %v1075 = vpop.f32.mrf.mxu0
        %v1076 = vadd.f32 0.0, %v1075
        %v1077 = vpop.f32.mrf.mxu0
        %1078 = vmatprep.mubr.f32.mxu0 0.0
        %1079 = vmatmul.mubr.f32.gmra.mxu0 %v1007
        %v1080 = vpop.f32.mrf.mxu0
        %v1081 = vadd.f32 0.0, %v1080
        %v1082 = vpop.f32.mrf.mxu0
        %1083 = vdwg.mxu0
        %v1085 = vsel %vm521, %v957, 0
        %v1088 = vsel %vm521, %v958, 0
        %1090 = vmatprep.subr.mxu0 0.0
        %1091 = vmatpush1.msra.mxu0 0.0
        %1092 = vmatprep.subr.mxu0 0.0
        %1093 = vmatpush1.msra.mxu0 0.0
        %1094 = vmatprep.subr.mxu0 0.0
        %1095 = vmatpush1.msra.mxu0 0.0
        %1096 = vmatprep.subr.mxu0 0.0
        %1097 = vmatpush1.msra.mxu0 0.0
        %1098 = vmatprep.subr.mxu0 0.0
        %1099 = vmatpush1.msra.mxu0 0.0
        %1100 = vmatprep.subr.mxu0 0.0
        %1101 = vmatpush1.msra.mxu0 0.0
        %1102 = vmatprep.subr.mxu0 0.0
        %1103 = vmatpush1.msra.mxu0 0.0
        %1104 = vmatprep.subr.mxu0 0.0
        %1105 = vmatpush1.msra.mxu0 0.0
        %1106 = vmatprep.subr.mxu0 0.0
        %1107 = vmatpush1.msra.mxu0 0.0
        %1108 = vmatprep.subr.mxu0 0.0
        %1109 = vmatpush1.msra.mxu0 0.0
        %1110 = vmatprep.subr.mxu0 0.0
        %1111 = vmatpush1.msra.mxu0 0.0
        %1112 = vmatprep.subr.mxu0 0.0
        %1113 = vmatpush1.msra.mxu0 0.0
        %1114 = vmatprep.subr.mxu0 0.0
        %1115 = vmatpush1.msra.mxu0 0.0
        %1116 = vmatprep.subr.mxu0 0.0
        %1117 = vmatpush1.msra.mxu0 0.0
        %1118 = vmatprep.subr.mxu0 0.0
        %1119 = vmatpush1.msra.mxu0 %v998
        %1120 = vmatprep.subr.mxu0 0.0
        %1121 = vmatpush1.msra.mxu0 %v997
        %1122 = vmatprep.subr.mxu0 0.0
        %1123 = vmatpush2.msra.mxu0 0.0
        %1124 = vmatprep.subr.mxu0 0.0
        %1125 = vmatpush2.msra.mxu0 0.0
        %1126 = vmatprep.subr.mxu0 0.0
        %1127 = vmatpush2.msra.mxu0 0.0
        %1128 = vmatprep.subr.mxu0 0.0
        %1129 = vmatpush2.msra.mxu0 0.0
        %1130 = vmatprep.subr.mxu0 0.0
        %1131 = vmatpush2.msra.mxu0 0.0
        %1132 = vmatprep.subr.mxu0 0.0
        %1133 = vmatpush2.msra.mxu0 0.0
        %1134 = vmatprep.subr.mxu0 0.0
        %1135 = vmatpush2.msra.mxu0 0.0
        %1136 = vmatprep.subr.mxu0 0.0
        %1137 = vmatpush2.msra.mxu0 0.0
        %1138 = vmatprep.subr.mxu0 0.0
        %1139 = vmatpush2.msra.mxu0 0.0
        %1140 = vmatprep.subr.mxu0 0.0
        %1141 = vmatpush2.msra.mxu0 0.0
        %1142 = vmatprep.subr.mxu0 0.0
        %1143 = vmatpush2.msra.mxu0 0.0
        %1144 = vmatprep.subr.mxu0 0.0
        %1145 = vmatpush2.msra.mxu0 0.0
        %1146 = vmatprep.subr.mxu0 0.0
        %1147 = vmatpush2.msra.mxu0 0.0
        %1148 = vmatprep.subr.mxu0 0.0
        %1149 = vmatpush2.msra.mxu0 0.0
        %1150 = vmatprep.subr.mxu0 0.0
        %1151 = vmatpush2.msra.mxu0 0.0
        %1152 = vmatprep.subr.mxu0 0.0
        %1153 = vmatpush2.msra.mxu0 0.0
        %1154 = vmatprep.mubr.f32.mxu0 0.0
        %1155 = vmatmul.mubr.f32.gmra.mxu0 %v1085
        %v1156 = vpop.f32.mrf.mxu0
        %v1157 = vadd.f32 0.0, %v1156
        %v1158 = vpop.f32.mrf.mxu0
        %1159 = vmatprep.mubr.f32.mxu0 0.0
        %1160 = vmatmul.mubr.f32.gmra.mxu0 %v1088
        %v1161 = vpop.f32.mrf.mxu0
        %v1162 = vadd.f32 0.0, %v1161
        %v1163 = vpop.f32.mrf.mxu0
        %1164 = vdwg.mxu0
        %v1166 = vsel %vm521, %v959, 0
        %v1169 = vsel %vm521, %v960, 0
        %1171 = vmatprep.subr.mxu0 0.0
        %1172 = vmatpush1.msra.mxu0 0.0
        %1173 = vmatprep.subr.mxu0 0.0
        %1174 = vmatpush1.msra.mxu0 0.0
        %1175 = vmatprep.subr.mxu0 0.0
        %1176 = vmatpush1.msra.mxu0 0.0
        %1177 = vmatprep.subr.mxu0 0.0
        %1178 = vmatpush1.msra.mxu0 0.0
        %1179 = vmatprep.subr.mxu0 0.0
        %1180 = vmatpush1.msra.mxu0 0.0
        %1181 = vmatprep.subr.mxu0 0.0
        %1182 = vmatpush1.msra.mxu0 0.0
        %1183 = vmatprep.subr.mxu0 0.0
        %1184 = vmatpush1.msra.mxu0 0.0
        %1185 = vmatprep.subr.mxu0 0.0
        %1186 = vmatpush1.msra.mxu0 0.0
        %1187 = vmatprep.subr.mxu0 0.0
        %1188 = vmatpush1.msra.mxu0 0.0
        %1189 = vmatprep.subr.mxu0 0.0
        %1190 = vmatpush1.msra.mxu0 0.0
        %1191 = vmatprep.subr.mxu0 0.0
        %1192 = vmatpush1.msra.mxu0 0.0
        %1193 = vmatprep.subr.mxu0 0.0
        %1194 = vmatpush1.msra.mxu0 0.0
        %1195 = vmatprep.subr.mxu0 0.0
        %1196 = vmatpush1.msra.mxu0 0.0
        %1197 = vmatprep.subr.mxu0 0.0
        %1198 = vmatpush1.msra.mxu0 0.0
        %1199 = vmatprep.subr.mxu0 0.0
        %1200 = vmatpush1.msra.mxu0 %v1000
        %1201 = vmatprep.subr.mxu0 0.0
        %1202 = vmatpush1.msra.mxu0 %v999
        %1203 = vmatprep.subr.mxu0 0.0
        %1204 = vmatpush2.msra.mxu0 0.0
        %1205 = vmatprep.subr.mxu0 0.0
        %1206 = vmatpush2.msra.mxu0 0.0
        %1207 = vmatprep.subr.mxu0 0.0
        %1208 = vmatpush2.msra.mxu0 0.0
        %1209 = vmatprep.subr.mxu0 0.0
        %1210 = vmatpush2.msra.mxu0 0.0
        %1211 = vmatprep.subr.mxu0 0.0
        %1212 = vmatpush2.msra.mxu0 0.0
        %1213 = vmatprep.subr.mxu0 0.0
        %1214 = vmatpush2.msra.mxu0 0.0
        %1215 = vmatprep.subr.mxu0 0.0
        %1216 = vmatpush2.msra.mxu0 0.0
        %1217 = vmatprep.subr.mxu0 0.0
        %1218 = vmatpush2.msra.mxu0 0.0
        %1219 = vmatprep.subr.mxu0 0.0
        %1220 = vmatpush2.msra.mxu0 0.0
        %1221 = vmatprep.subr.mxu0 0.0
        %1222 = vmatpush2.msra.mxu0 0.0
        %1223 = vmatprep.subr.mxu0 0.0
        %1224 = vmatpush2.msra.mxu0 0.0
        %1225 = vmatprep.subr.mxu0 0.0
        %1226 = vmatpush2.msra.mxu0 0.0
        %1227 = vmatprep.subr.mxu0 0.0
        %1228 = vmatpush2.msra.mxu0 0.0
        %1229 = vmatprep.subr.mxu0 0.0
        %1230 = vmatpush2.msra.mxu0 0.0
        %1231 = vmatprep.subr.mxu0 0.0
        %1232 = vmatpush2.msra.mxu0 0.0
        %1233 = vmatprep.subr.mxu0 0.0
        %1234 = vmatpush2.msra.mxu0 0.0
        %1235 = vmatprep.mubr.f32.mxu0 0.0
        %1236 = vmatmul.mubr.f32.gmra.mxu0 %v1166
        %v1237 = vpop.f32.mrf.mxu0
        %v1238 = vadd.f32 0.0, %v1237
        %v1239 = vpop.f32.mrf.mxu0
        %1240 = vmatprep.mubr.f32.mxu0 0.0
        %1241 = vmatmul.mubr.f32.gmra.mxu0 %v1169
        %v1242 = vpop.f32.mrf.mxu0
        %v1243 = vadd.f32 0.0, %v1242
        %v1244 = vpop.f32.mrf.mxu0
        %1245 = vdwg.mxu0
        %v1247 = vsel %vm521, %v961, 0
        %v1250 = vsel %vm521, %v962, 0
        %1252 = vmatprep.subr.mxu0 0.0
        %1253 = vmatpush1.msra.mxu0 0.0
        %1254 = vmatprep.subr.mxu0 0.0
        %1255 = vmatpush1.msra.mxu0 0.0
        %1256 = vmatprep.subr.mxu0 0.0
        %1257 = vmatpush1.msra.mxu0 0.0
        %1258 = vmatprep.subr.mxu0 0.0
        %1259 = vmatpush1.msra.mxu0 0.0
        %1260 = vmatprep.subr.mxu0 0.0
        %1261 = vmatpush1.msra.mxu0 0.0
        %1262 = vmatprep.subr.mxu0 0.0
        %1263 = vmatpush1.msra.mxu0 0.0
        %1264 = vmatprep.subr.mxu0 0.0
        %1265 = vmatpush1.msra.mxu0 0.0
        %1266 = vmatprep.subr.mxu0 0.0
        %1267 = vmatpush1.msra.mxu0 0.0
        %1268 = vmatprep.subr.mxu0 0.0
        %1269 = vmatpush1.msra.mxu0 0.0
        %1270 = vmatprep.subr.mxu0 0.0
        %1271 = vmatpush1.msra.mxu0 0.0
        %1272 = vmatprep.subr.mxu0 0.0
        %1273 = vmatpush1.msra.mxu0 0.0
        %1274 = vmatprep.subr.mxu0 0.0
        %1275 = vmatpush1.msra.mxu0 0.0
        %1276 = vmatprep.subr.mxu0 0.0
        %1277 = vmatpush1.msra.mxu0 0.0
        %1278 = vmatprep.subr.mxu0 0.0
        %1279 = vmatpush1.msra.mxu0 0.0
        %1280 = vmatprep.subr.mxu0 0.0
        %1281 = vmatpush1.msra.mxu0 %v1002
        %1282 = vmatprep.subr.mxu0 0.0
        %1283 = vmatpush1.msra.mxu0 %v1001
        %1284 = vmatprep.subr.mxu0 0.0
        %1285 = vmatpush2.msra.mxu0 0.0
        %1286 = vmatprep.subr.mxu0 0.0
        %1287 = vmatpush2.msra.mxu0 0.0
        %1288 = vmatprep.subr.mxu0 0.0
        %1289 = vmatpush2.msra.mxu0 0.0
        %1290 = vmatprep.subr.mxu0 0.0
        %1291 = vmatpush2.msra.mxu0 0.0
        %1292 = vmatprep.subr.mxu0 0.0
        %1293 = vmatpush2.msra.mxu0 0.0
        %1294 = vmatprep.subr.mxu0 0.0
        %1295 = vmatpush2.msra.mxu0 0.0
        %1296 = vmatprep.subr.mxu0 0.0
        %1297 = vmatpush2.msra.mxu0 0.0
        %1298 = vmatprep.subr.mxu0 0.0
        %1299 = vmatpush2.msra.mxu0 0.0
        %1300 = vmatprep.subr.mxu0 0.0
        %1301 = vmatpush2.msra.mxu0 0.0
        %1302 = vmatprep.subr.mxu0 0.0
        %1303 = vmatpush2.msra.mxu0 0.0
        %1304 = vmatprep.subr.mxu0 0.0
        %1305 = vmatpush2.msra.mxu0 0.0
        %1306 = vmatprep.subr.mxu0 0.0
        %1307 = vmatpush2.msra.mxu0 0.0
        %1308 = vmatprep.subr.mxu0 0.0
        %1309 = vmatpush2.msra.mxu0 0.0
        %1310 = vmatprep.subr.mxu0 0.0
        %1311 = vmatpush2.msra.mxu0 0.0
        %1312 = vmatprep.subr.mxu0 0.0
        %1313 = vmatpush2.msra.mxu0 0.0
        %1314 = vmatprep.subr.mxu0 0.0
        %1315 = vmatpush2.msra.mxu0 0.0
        %1316 = vmatprep.mubr.f32.mxu0 0.0
        %1317 = vmatmul.mubr.f32.gmra.mxu0 %v1247
        %v1318 = vpop.f32.mrf.mxu0
        %v1319 = vadd.f32 0.0, %v1318
        %v1320 = vpop.f32.mrf.mxu0
        %1321 = vmatprep.mubr.f32.mxu0 0.0
        %1322 = vmatmul.mubr.f32.gmra.mxu0 %v1250
        %v1323 = vpop.f32.mrf.mxu0
        %v1324 = vadd.f32 0.0, %v1323
        %v1325 = vpop.f32.mrf.mxu0
        %1326 = vdwg.mxu0
        %v1327 = vmul.f32 %v1076, %v987
        %v1328 = vmul.f32 %v1081, %v988
        %v1329 = vmul.f32 %v1157, %v989
        %v1330 = vmul.f32 %v1162, %v990
        %v1331 = vmul.f32 %v1238, %v991
        %v1332 = vmul.f32 %v1243, %v992
        %v1333 = vmul.f32 %v1319, %v993
        %v1334 = vmul.f32 %v1324, %v994
        %v1335 = vld [vmem:[%s3] sm:$0xff]
        %v1336 = vld [vmem:[%s3 + $0x8] sm:$0xff]
        %v1337 = vld [vmem:[%s3 + $0x10] sm:$0xff]
        %v1338 = vld [vmem:[%s3 + $0x18] sm:$0xff]
        %v1340 = vsel %vm258, %v1327, 0
        %v1343 = vsel %vm258, %v1328, 0
        %v1346 = vsel %vm258, %v1329, 0
        %v1349 = vsel %vm258, %v1330, 0
        %v1352 = vsel %vm258, %v1331, 0
        %v1355 = vsel %vm258, %v1332, 0
        %v1358 = vsel %vm258, %v1333, 0
        %v1361 = vsel %vm258, %v1334, 0
        %1363 = vmatprep.subr.mxu0 0.0
        %1364 = vmatpush1.msra.mxu0 0.0
        %1365 = vmatprep.subr.mxu0 0.0
        %1366 = vmatpush1.msra.mxu0 0.0
        %1367 = vmatprep.subr.mxu0 0.0
        %1368 = vmatpush1.msra.mxu0 0.0
        %1369 = vmatprep.subr.mxu0 0.0
        %1370 = vmatpush1.msra.mxu0 0.0
        %1371 = vmatprep.subr.mxu0 0.0
        %1372 = vmatpush1.msra.mxu0 0.0
        %1373 = vmatprep.subr.mxu0 0.0
        %1374 = vmatpush1.msra.mxu0 0.0
        %1375 = vmatprep.subr.mxu0 0.0
        %1376 = vmatpush1.msra.mxu0 0.0
        %1377 = vmatprep.subr.mxu0 0.0
        %1378 = vmatpush1.msra.mxu0 0.0
        %1379 = vmatprep.subr.mxu0 0.0
        %1380 = vmatpush1.msra.mxu0 0.0
        %1381 = vmatprep.subr.mxu0 0.0
        %1382 = vmatpush1.msra.mxu0 0.0
        %1383 = vmatprep.subr.mxu0 0.0
        %1384 = vmatpush1.msra.mxu0 0.0
        %1385 = vmatprep.subr.mxu0 0.0
        %1386 = vmatpush1.msra.mxu0 0.0
        %1387 = vmatprep.subr.mxu0 0.0
        %1388 = vmatpush1.msra.mxu0 %v1338
        %1389 = vmatprep.subr.mxu0 0.0
        %1390 = vmatpush1.msra.mxu0 %v1337
        %1391 = vmatprep.subr.mxu0 0.0
        %1392 = vmatpush1.msra.mxu0 %v1336
        %1393 = vmatprep.subr.mxu0 0.0
        %1394 = vmatpush1.msra.mxu0 %v1335
        %1395 = vmatprep.subr.mxu0 0.0
        %1396 = vmatpush2.msra.mxu0 0.0
        %1397 = vmatprep.subr.mxu0 0.0
        %1398 = vmatpush2.msra.mxu0 0.0
        %1399 = vmatprep.subr.mxu0 0.0
        %1400 = vmatpush2.msra.mxu0 0.0
        %1401 = vmatprep.subr.mxu0 0.0
        %1402 = vmatpush2.msra.mxu0 0.0
        %1403 = vmatprep.subr.mxu0 0.0
        %1404 = vmatpush2.msra.mxu0 0.0
        %1405 = vmatprep.subr.mxu0 0.0
        %1406 = vmatpush2.msra.mxu0 0.0
        %1407 = vmatprep.subr.mxu0 0.0
        %1408 = vmatpush2.msra.mxu0 0.0
        %1409 = vmatprep.subr.mxu0 0.0
        %1410 = vmatpush2.msra.mxu0 0.0
        %1411 = vmatprep.subr.mxu0 0.0
        %1412 = vmatpush2.msra.mxu0 0.0
        %1413 = vmatprep.subr.mxu0 0.0
        %1414 = vmatpush2.msra.mxu0 0.0
        %1415 = vmatprep.subr.mxu0 0.0
        %1416 = vmatpush2.msra.mxu0 0.0
        %1417 = vmatprep.subr.mxu0 0.0
        %1418 = vmatpush2.msra.mxu0 0.0
        %1419 = vmatprep.subr.mxu0 0.0
        %1420 = vmatpush2.msra.mxu0 0.0
        %1421 = vmatprep.subr.mxu0 0.0
        %1422 = vmatpush2.msra.mxu0 0.0
        %1423 = vmatprep.subr.mxu0 0.0
        %1424 = vmatpush2.msra.mxu0 0.0
        %1425 = vmatprep.subr.mxu0 0.0
        %1426 = vmatpush2.msra.mxu0 0.0
        %1427 = vmatprep.mubr.f32.mxu0 0.0
        %1428 = vmatmul.mubr.f32.gmra.mxu0 %v1340
        %v1429 = vpop.f32.mrf.mxu0
        %v1430 = vadd.f32 0.0, %v1429
        %v1431 = vpop.f32.mrf.mxu0
        %1432 = vmatprep.mubr.f32.mxu0 0.0
        %1433 = vmatmul.mubr.f32.gmra.mxu0 %v1343
        %v1434 = vpop.f32.mrf.mxu0
        %v1435 = vadd.f32 0.0, %v1434
        %v1436 = vpop.f32.mrf.mxu0
        %1437 = vmatprep.mubr.f32.mxu0 0.0
        %1438 = vmatmul.mubr.f32.gmra.mxu0 %v1346
        %v1439 = vpop.f32.mrf.mxu0
        %v1440 = vadd.f32 0.0, %v1439
        %v1441 = vpop.f32.mrf.mxu0
        %1442 = vmatprep.mubr.f32.mxu0 0.0
        %1443 = vmatmul.mubr.f32.gmra.mxu0 %v1349
        %v1444 = vpop.f32.mrf.mxu0
        %v1445 = vadd.f32 0.0, %v1444
        %v1446 = vpop.f32.mrf.mxu0
        %1447 = vmatprep.mubr.f32.mxu0 0.0
        %1448 = vmatmul.mubr.f32.gmra.mxu0 %v1352
        %v1449 = vpop.f32.mrf.mxu0
        %v1450 = vadd.f32 0.0, %v1449
        %v1451 = vpop.f32.mrf.mxu0
        %1452 = vmatprep.mubr.f32.mxu0 0.0
        %1453 = vmatmul.mubr.f32.gmra.mxu0 %v1355
        %v1454 = vpop.f32.mrf.mxu0
        %v1455 = vadd.f32 0.0, %v1454
        %v1456 = vpop.f32.mrf.mxu0
        %1457 = vmatprep.mubr.f32.mxu0 0.0
        %1458 = vmatmul.mubr.f32.gmra.mxu0 %v1358
        %v1459 = vpop.f32.mrf.mxu0
        %v1460 = vadd.f32 0.0, %v1459
        %v1461 = vpop.f32.mrf.mxu0
        %1462 = vmatprep.mubr.f32.mxu0 0.0
        %1463 = vmatmul.mubr.f32.gmra.mxu0 %v1361
        %v1464 = vpop.f32.mrf.mxu0
        %v1465 = vadd.f32 0.0, %v1464
        %v1466 = vpop.f32.mrf.mxu0
        %1467 = vdwg.mxu0
        %v1468 = vmax.f32 %v1430, 0.0
        %v1469 = vmax.f32 %v1435, 0.0
        %v1470 = vmax.f32 %v1440, 0.0
        %v1471 = vmax.f32 %v1445, 0.0
        %v1472 = vmax.f32 %v1450, 0.0
        %v1473 = vmax.f32 %v1455, 0.0
        %v1474 = vmax.f32 %v1460, 0.0
        %v1475 = vmax.f32 %v1465, 0.0
        %1476 = vst.msk [vmem:[%s243] sm:$0xff] %vm258, %v1468
        %1477 = vst.msk [vmem:[%s243 + $0x8] sm:$0xff] %vm258, %v1469
        %1478 = vst.msk [vmem:[%s243 + $0x10] sm:$0xff] %vm258, %v1470
        %1479 = vst.msk [vmem:[%s243 + $0x18] sm:$0xff] %vm258, %v1471
        %1480 = vst.msk [vmem:[%s243 + $0x20] sm:$0xff] %vm258, %v1472
        %1481 = vst.msk [vmem:[%s243 + $0x28] sm:$0xff] %vm258, %v1473
        %1482 = vst.msk [vmem:[%s243 + $0x30] sm:$0xff] %vm258, %v1474
        %1483 = vst.msk [vmem:[%s243 + $0x38] sm:$0xff] %vm258, %v1475
        %s1484 = sand.u32 %s140, 1
        %s1485 = scalar_lea.sflag [#allocation4], %s1484
        %s1486 = sand.u32 %s140, 1
        %s1487 = smul.addr %s1486, 64
        %s1488 = scalar_lea.vmem [#allocation5], %s1487
        // Predicated region
        $region45: #{s_gnn_forward.1} parent=39 // pred_check
          %p1489 = pneg %p150
        $region46: #{s_gnn_forward.1} parent=39 // pred_check_branch
          %1491 = sbr.rel (%p1489) target = $region48
        $region47: #{s_gnn_forward.1} parent=39 // pred_region
          %s1492 = smul.u32 4, %s22
          %s1494 = ssub.s32 1024, 1024
          %1495 = vsyncadd %s1485, %s1494
          %s1496 = smul.addr %s1492, 2
          %s1497 = smul.addr %s1496, 128
          %s1498 = scalar_lea.hbm %s5, %s1497
          %s1499 = sshll.u32 %s1488, 4
          %s1500 = int_to_ptr.vmem [resolvable:$true] %s1499
          %1505 = dma.vmem_to_hbm [thread:$0]  %s1500, 1024, %s1498, %s1485, 128, 128, 8
        $region48: #{s_gnn_forward.1} parent=39 // pred_fallthru
          _
      $region40: #{s_gnn_forward.1} parent=5 // pred_fallthru
        _
      %p1506 = scmp.le.s32.totalorder 2, %s17
      // Predicated region
      $region49: #{s_gnn_forward.1} parent=5 // pred_check
        %p1507 = pneg %p1506
      $region50: #{s_gnn_forward.1} parent=5 // pred_check_branch
        %1509 = sbr.rel (%p1507) target = $region52
      $region51: #{s_gnn_forward.1} parent=5 // pred_region
        %s1510 = ssub.s32 %s17, 2
        // Predicated region
        $region53: #{s_gnn_forward.1} parent=51 // pred_check
          %p1511 = pneg %p156
        $region54: #{s_gnn_forward.1} parent=51 // pred_check_branch
          %1513 = sbr.rel (%p1511) target = $region56
        $region55: #{s_gnn_forward.1} parent=51 // pred_region
          %s1514 = sand.u32 %s141, 1
          %s1515 = scalar_lea.sflag [#allocation4], %s1514
          %s1516 = sand.u32 %s141, 1
          %s1517 = smul.addr %s1516, 64
          %s1518 = scalar_lea.vmem [#allocation5], %s1517
          %1519 = dma.done %s1515, 1024
        $region56: #{s_gnn_forward.1} parent=51 // pred_fallthru
          _
      $region52: #{s_gnn_forward.1} parent=5 // pred_fallthru
        _
    $region6: #{s_gnn_forward.1} parent=1 // loop_footer
      %s21 = sadd.s32 1, %s17
    $region7: #{s_gnn_forward.1} parent=1 // loop_footer_branch
      %16 = sbr.rel target = $region3
    $region8: #{s_gnn_forward.1} parent=1 // loop_exit
      _
    %1520 = vsyncpa [#allocation3], 1
    %s1521 = scalar_lea.sflag [#allocation3], 1
    %1522 = vsyncpa %s1521, 1
    %1523 = vsyncpa [#allocation4], 1
    %s1524 = scalar_lea.sflag [#allocation4], 1
    %1525 = vsyncpa %s1524, 1

</llo_original>
